<compile_context>
chip_gen: v6e
topology: v6e:2x2x1
jax: 0.10.0
libtpu: 0.0.40
codegen_flags: <defaults>
</compile_context>

<pallas_src>
import functools

import jax
import jax.numpy as jnp
from jax.experimental import pallas as pl
from jax.experimental.pallas import tpu as pltpu

EPS = 1e-7
NEG_SENTINEL = -1e9   # masked anchor-positive entries
POS_SENTINEL = 1e9    # masked anchor-negative entries


def _round_up(x, m):
    return ((x + m - 1) // m) * m


def _triplet_kernel(dap_ref, dan_ref, psum_ref, pcnt_ref, *, tp):
    """Grid step (i, j): anchor tile i x positive chunk j against all negatives."""
    j = pl.program_id(1)

    @pl.when(j == 0)
    def _():
        psum_ref[...] = jnp.zeros_like(psum_ref)
        pcnt_ref[...] = jnp.zeros_like(pcnt_ref)

    d_ap = dap_ref[...]      # (ta, tp)  masked -> -1e9, margin already folded in
    d_an = dan_ref[...]      # (ta, Bn)  masked -> +1e9

    # triplet[a, p, n] = relu(d_ap'[a, p] - d_an'[a, n]); masked entries hit the
    # sentinels and clamp to exactly 0 (and count 0), matching the reference.
    t = jnp.maximum(d_ap[:, :, None] - d_an[:, None, :], 0.0)      # (ta, tp, Bn)

    # Anchor (leading) axis reduce: elementwise VALU adds, no XLU.
    s = jnp.sum(t, axis=0)                                          # (tp, Bn) f32
    c = jnp.sum((t > EPS).astype(jnp.int32), axis=0)                # (tp, Bn) i32

    # Fold the tp/8 sublane groups with elementwise adds (no sublane XLU reduce);
    # the final cross-sublane / cross-lane reduce happens in the JAX wrapper.
    acc_s = s[0:8]
    acc_c = c[0:8]
    for g in range(1, tp // 8):
        acc_s = acc_s + s[g * 8:(g + 1) * 8]
        acc_c = acc_c + c[g * 8:(g + 1) * 8]
    psum_ref[...] += acc_s
    pcnt_ref[...] += acc_c


def cr_class_loss(logits, target, *, nclass, p_frac=None, margin=1.0,
                  anchor_tile=None):
    """Pallas implementation of CRClassLoss.forward (relative / triplet, k=None)."""
    B, C = logits.shape
    assert C == nclass
    p_frac = (1.0 / nclass) if p_frac is None else p_frac
    boundary = int(p_frac * B)

    # ---- glue: softmax, masks, class-axis collapse, mask/margin folding ------
    probs = jax.nn.softmax(logits.astype(jnp.float32), axis=-1)              # (B, C)
    onehot = jnp.arange(C, dtype=target.dtype)[None, :] == target[:, None]   # (B, C)
    counts = jnp.sum(onehot, axis=0)                                         # (C,)
    minor = (counts < boundary)[target]                                      # (B,)

    # Only c == target[a] contributes for anchor a (gather, not a matmul):
    #   p_col[a, i] = probs[i, target[a]]
    p_col = jnp.take(probs, target, axis=1).T                                # (B, B)
    p_self = jnp.take_along_axis(probs, target[:, None], axis=1)[:, 0]       # (B,)
    d_ap = jnp.abs(p_self[:, None] - p_col)                                  # (B, B)
    d_an = p_self[:, None] - p_col                                           # (B, B)

    same = target[:, None] == target[None, :]                                # (B, B)
    not_eye = ~jnp.eye(B, dtype=bool)
    m_ap = minor[:, None] & same & not_eye                                   # (B, B)
    m_an = minor[:, None] & ~same                                            # (B, B)

    # Fold masks + margin into the operands (finite sentinels, no inf-inf NaNs).
    dap_f = jnp.where(m_ap, d_ap + margin, NEG_SENTINEL)
    dan_f = jnp.where(m_an, d_an, POS_SENTINEL)

    # ---- padding / tiling -----------------------------------------------------
    TP = 128                              # positive chunk: lane-aligned grid axis
    Bn = _round_up(B, 128)                # negative axis: lane-dense
    Bp = _round_up(B, TP)                 # positive axis padded to chunk multiple

    # Anchor tile sized so the live (ta, TP, Bn) slab (x2 for the count temp)
    # stays ~<= 8 MiB: fits v7x's 64 MiB physical VMEM and default scoped limits.
    slab_budget = 8 << 20
    ta_cap = max(8, (slab_budget // (2 * TP * Bn * 4)) // 8 * 8)
    ta = anchor_tile or min(64, ta_cap, _round_up(B, 8))
    ta = max(8, ta - ta % 8)
    Ba = _round_up(B, ta)
    n_tiles = Ba // ta

    dap_p = jnp.pad(dap_f, ((0, Ba - B), (0, Bp - B)),
                    constant_values=NEG_SENTINEL)
    dan_p = jnp.pad(dan_f, ((0, Ba - B), (0, Bn - B)),
                    constant_values=POS_SENTINEL)

    vmem_limit = min(
        48 << 20,                                 # v7x physical-VMEM headroom
        max(16 << 20,
            2 * ta * TP * Bn * 4                  # live triplet slab + count temp
            + 2 * 2 * (ta * TP + ta * Bn) * 4     # double-buffered input tiles
            + 2 * 2 * 8 * Bn * 4                  # resident output partials
            + (4 << 20)))                         # headroom

    psum, pcnt = pl.pallas_call(
        functools.partial(_triplet_kernel, tp=TP),
        grid=(n_tiles, Bp // TP),
        in_specs=[
            pl.BlockSpec((ta, TP), lambda i, j: (i, j)),   # d_ap' tile
            pl.BlockSpec((ta, Bn), lambda i, j: (i, 0)),   # d_an' tile (reused over j)
        ],
        out_specs=(
            pl.BlockSpec((8, Bn), lambda i, j: (i, 0)),    # per-tile partial sums
            pl.BlockSpec((8, Bn), lambda i, j: (i, 0)),    # per-tile partial counts
        ),
        out_shape=(
            jax.ShapeDtypeStruct((n_tiles * 8, Bn), jnp.float32),
            jax.ShapeDtypeStruct((n_tiles * 8, Bn), jnp.int32),
        ),
        compiler_params=pltpu.CompilerParams(
            dimension_semantics=("parallel", "arbitrary"),
            vmem_limit_bytes=int(vmem_limit)),
    )(dap_p, dan_p)

    total = jnp.sum(psum)
    count = jnp.sum(pcnt).astype(jnp.float32)
    return total / (count + EPS)


def cr_class_loss_ref(logits, target, *, nclass, p_frac=None, margin=1.0):
    """Pure-JAX reference mirroring the PyTorch module exactly (full (B,B,B,C))."""
    B, C = logits.shape
    p_frac = (1.0 / nclass) if p_frac is None else p_frac
    boundary = int(p_frac * B)

    probs = jax.nn.softmax(logits.astype(jnp.float32), axis=-1)
    d_ap = jnp.abs(probs[:, None, :] - probs[None, :, :])    # (B, B, C)
    d_an = probs[:, None, :] - probs[None, :, :]             # (B, B, C)

    onehot = jnp.arange(C, dtype=target.dtype)[None, :] == target[:, None]
    counts = jnp.sum(onehot, axis=0)
    mask_sparse = (counts < boundary)[target]
    m_anchor = onehot & mask_sparse[:, None]
    m_hp = onehot
    m_hn = ~onehot

    mask_ap = m_anchor[:, None, :] & m_hp[None, :, :]
    mask_ap = mask_ap & (~jnp.eye(B, dtype=bool))[:, :, None]
    mask_an = m_anchor[:, None, :] & m_hn[None, :, :]

    t = d_ap[:, :, None, :] - d_an[:, None, :, :] + margin
    mask = mask_ap[:, :, None, :] & mask_an[:, None, :, :]
    t = jnp.maximum(mask.astype(jnp.float32) * t, 0.0)
    num_pos = jnp.sum(t > EPS).astype(jnp.float32)
    return jnp.sum(t) / (num_pos + EPS)


if __name__ == "__main__":
    key = jax.random.PRNGKey(0)
    B, nclass = 16, 4
    logits = jax.random.normal(key, (B, nclass), dtype=jnp.float32)
    # class counts: 7, 5, 2, 2; boundary = int(B / nclass) = 4 -> classes 2, 3 are minor.
    target = jnp.array([0, 0, 0, 0, 0, 0, 0, 1, 1, 1, 1, 1, 2, 2, 3, 3],
                       dtype=jnp.int32)

    loss = cr_class_loss(logits, target, nclass=nclass, margin=1.0)
    loss = jax.block_until_ready(loss)

    ref = cr_class_loss_ref(logits, target, nclass=nclass, margin=1.0)
    assert jnp.allclose(loss, ref, rtol=1e-5, atol=1e-6), (loss, ref)
    print("KERNEL_OK")
</pallas_src>

<mosaic_0001>
module attributes {stable_mosaic.version = 11 : i64} {
  func.func @_triplet_kernel(%arg0: i32, %arg1: i32, %arg2: memref<16x128xf32, #tpu.memory_space<vmem>>, %arg3: memref<16x128xf32, #tpu.memory_space<vmem>>, %arg4: memref<8x128xf32, #tpu.memory_space<vmem>>, %arg5: memref<8x128xi32, #tpu.memory_space<vmem>>) attributes {dimension_semantics = [#tpu.dimension_semantics<parallel>, #tpu.dimension_semantics<arbitrary>], iteration_bounds = array<i64: 1, 1>, scalar_prefetch = 0 : i64, scratch_operands = 0 : i64, tpu.core_type = #tpu.core_type<tc>, window_params = [{transform_indices = @transform_0, window_bounds = array<i64: 16, 128>}, {transform_indices = @transform_1, window_bounds = array<i64: 16, 128>}, {transform_indices = @transform_2, window_bounds = array<i64: 8, 128>}, {transform_indices = @transform_3, window_bounds = array<i64: 8, 128>}]} {
    %c0_i32 = arith.constant 0 : i32
    %0 = arith.cmpi eq, %arg1, %c0_i32 : i32
    %1 = arith.extui %0 : i1 to i32
    %c0_i32_0 = arith.constant 0 : i32
    %2 = arith.cmpi ne, %1, %c0_i32_0 : i32
    scf.if %2 {
      %cst_15 = arith.constant 0.000000e+00 : f32
      %85 = vector.broadcast %cst_15 : f32 to vector<8x128xf32>
      %c0_16 = arith.constant 0 : index
      %c0_17 = arith.constant 0 : index
      %86 = vector.load %arg4[%c0_16, %c0_17] : memref<8x128xf32, #tpu.memory_space<vmem>>, vector<8x128xf32>
      tpu.vector_store %arg4[%c0_16, %c0_17], %85 {strides = array<i32>} : memref<8x128xf32, #tpu.memory_space<vmem>>, vector<8x128xf32>,
      %c0_i32_18 = arith.constant 0 : i32
      %87 = vector.broadcast %c0_i32_18 : i32 to vector<8x128xi32>
      %c0_19 = arith.constant 0 : index
      %c0_20 = arith.constant 0 : index
      %88 = vector.load %arg5[%c0_19, %c0_20] : memref<8x128xi32, #tpu.memory_space<vmem>>, vector<8x128xi32>
      tpu.vector_store %arg5[%c0_19, %c0_20], %87 {strides = array<i32>} : memref<8x128xi32, #tpu.memory_space<vmem>>, vector<8x128xi32>,
    } else {
    }
    %c0 = arith.constant 0 : index
    %c0_1 = arith.constant 0 : index
    %3 = vector.load %arg2[%c0, %c0_1] : memref<16x128xf32, #tpu.memory_space<vmem>>, vector<16x128xf32>
    %c0_2 = arith.constant 0 : index
    %c0_3 = arith.constant 0 : index
    %4 = vector.load %arg3[%c0_2, %c0_3] : memref<16x128xf32, #tpu.memory_space<vmem>>, vector<16x128xf32>
    %5 = vector.shape_cast %3 : vector<16x128xf32> to vector<16x128x1xf32>
    %6 = vector.shape_cast %4 : vector<16x128xf32> to vector<16x1x128xf32>
    %7 = vector.broadcast %5 : vector<16x128x1xf32> to vector<16x128x128xf32>
    %8 = vector.broadcast %6 : vector<16x1x128xf32> to vector<16x128x128xf32>
    %9 = arith.subf %7, %8 : vector<16x128x128xf32>
    %cst = arith.constant 0.000000e+00 : f32
    %10 = vector.broadcast %cst : f32 to vector<16x128x128xf32>
    %11 = arith.maximumf %9, %10 : vector<16x128x128xf32>
    %cst_4 = arith.constant dense<0.000000e+00> : vector<128x128xf32>
    %12 = vector.multi_reduction <add>, %11, %cst_4 [0] : vector<16x128x128xf32> to vector<128x128xf32>
    %cst_5 = arith.constant 1.000000e-07 : f32
    %13 = vector.broadcast %cst_5 : f32 to vector<16x128x128xf32>
    %14 = arith.cmpf ogt, %11, %13 : vector<16x128x128xf32>
    %15 = arith.extui %14 : vector<16x128x128xi1> to vector<16x128x128xi32>
    %cst_6 = arith.constant dense<0> : vector<128x128xi32>
    %16 = vector.multi_reduction <add>, %15, %cst_6 [0] : vector<16x128x128xi32> to vector<128x128xi32>
    %17 = vector.extract_strided_slice %12 {offsets = [0, 0], sizes = [8, 128], strides = [1, 1]} : vector<128x128xf32> to vector<8x128xf32>
    %18 = vector.extract_strided_slice %16 {offsets = [0, 0], sizes = [8, 128], strides = [1, 1]} : vector<128x128xi32> to vector<8x128xi32>
    %19 = vector.extract_strided_slice %12 {offsets = [8, 0], sizes = [8, 128], strides = [1, 1]} : vector<128x128xf32> to vector<8x128xf32>
    %20 = arith.addf %17, %19 : vector<8x128xf32>
    %21 = vector.extract_strided_slice %16 {offsets = [8, 0], sizes = [8, 128], strides = [1, 1]} : vector<128x128xi32> to vector<8x128xi32>
    %22 = arith.addi %18, %21 : vector<8x128xi32>
    %23 = vector.extract_strided_slice %12 {offsets = [16, 0], sizes = [8, 128], strides = [1, 1]} : vector<128x128xf32> to vector<8x128xf32>
    %24 = arith.addf %20, %23 : vector<8x128xf32>
    %25 = vector.extract_strided_slice %16 {offsets = [16, 0], sizes = [8, 128], strides = [1, 1]} : vector<128x128xi32> to vector<8x128xi32>
    %26 = arith.addi %22, %25 : vector<8x128xi32>
    %27 = vector.extract_strided_slice %12 {offsets = [24, 0], sizes = [8, 128], strides = [1, 1]} : vector<128x128xf32> to vector<8x128xf32>
    %28 = arith.addf %24, %27 : vector<8x128xf32>
    %29 = vector.extract_strided_slice %16 {offsets = [24, 0], sizes = [8, 128], strides = [1, 1]} : vector<128x128xi32> to vector<8x128xi32>
    %30 = arith.addi %26, %29 : vector<8x128xi32>
    %31 = vector.extract_strided_slice %12 {offsets = [32, 0], sizes = [8, 128], strides = [1, 1]} : vector<128x128xf32> to vector<8x128xf32>
    %32 = arith.addf %28, %31 : vector<8x128xf32>
    %33 = vector.extract_strided_slice %16 {offsets = [32, 0], sizes = [8, 128], strides = [1, 1]} : vector<128x128xi32> to vector<8x128xi32>
    %34 = arith.addi %30, %33 : vector<8x128xi32>
    %35 = vector.extract_strided_slice %12 {offsets = [40, 0], sizes = [8, 128], strides = [1, 1]} : vector<128x128xf32> to vector<8x128xf32>
    %36 = arith.addf %32, %35 : vector<8x128xf32>
    %37 = vector.extract_strided_slice %16 {offsets = [40, 0], sizes = [8, 128], strides = [1, 1]} : vector<128x128xi32> to vector<8x128xi32>
    %38 = arith.addi %34, %37 : vector<8x128xi32>
    %39 = vector.extract_strided_slice %12 {offsets = [48, 0], sizes = [8, 128], strides = [1, 1]} : vector<128x128xf32> to vector<8x128xf32>
    %40 = arith.addf %36, %39 : vector<8x128xf32>
    %41 = vector.extract_strided_slice %16 {offsets = [48, 0], sizes = [8, 128], strides = [1, 1]} : vector<128x128xi32> to vector<8x128xi32>
    %42 = arith.addi %38, %41 : vector<8x128xi32>
    %43 = vector.extract_strided_slice %12 {offsets = [56, 0], sizes = [8, 128], strides = [1, 1]} : vector<128x128xf32> to vector<8x128xf32>
    %44 = arith.addf %40, %43 : vector<8x128xf32>
    %45 = vector.extract_strided_slice %16 {offsets = [56, 0], sizes = [8, 128], strides = [1, 1]} : vector<128x128xi32> to vector<8x128xi32>
    %46 = arith.addi %42, %45 : vector<8x128xi32>
    %47 = vector.extract_strided_slice %12 {offsets = [64, 0], sizes = [8, 128], strides = [1, 1]} : vector<128x128xf32> to vector<8x128xf32>
    %48 = arith.addf %44, %47 : vector<8x128xf32>
    %49 = vector.extract_strided_slice %16 {offsets = [64, 0], sizes = [8, 128], strides = [1, 1]} : vector<128x128xi32> to vector<8x128xi32>
    %50 = arith.addi %46, %49 : vector<8x128xi32>
    %51 = vector.extract_strided_slice %12 {offsets = [72, 0], sizes = [8, 128], strides = [1, 1]} : vector<128x128xf32> to vector<8x128xf32>
    %52 = arith.addf %48, %51 : vector<8x128xf32>
    %53 = vector.extract_strided_slice %16 {offsets = [72, 0], sizes = [8, 128], strides = [1, 1]} : vector<128x128xi32> to vector<8x128xi32>
    %54 = arith.addi %50, %53 : vector<8x128xi32>
    %55 = vector.extract_strided_slice %12 {offsets = [80, 0], sizes = [8, 128], strides = [1, 1]} : vector<128x128xf32> to vector<8x128xf32>
    %56 = arith.addf %52, %55 : vector<8x128xf32>
    %57 = vector.extract_strided_slice %16 {offsets = [80, 0], sizes = [8, 128], strides = [1, 1]} : vector<128x128xi32> to vector<8x128xi32>
    %58 = arith.addi %54, %57 : vector<8x128xi32>
    %59 = vector.extract_strided_slice %12 {offsets = [88, 0], sizes = [8, 128], strides = [1, 1]} : vector<128x128xf32> to vector<8x128xf32>
    %60 = arith.addf %56, %59 : vector<8x128xf32>
    %61 = vector.extract_strided_slice %16 {offsets = [88, 0], sizes = [8, 128], strides = [1, 1]} : vector<128x128xi32> to vector<8x128xi32>
    %62 = arith.addi %58, %61 : vector<8x128xi32>
    %63 = vector.extract_strided_slice %12 {offsets = [96, 0], sizes = [8, 128], strides = [1, 1]} : vector<128x128xf32> to vector<8x128xf32>
    %64 = arith.addf %60, %63 : vector<8x128xf32>
    %65 = vector.extract_strided_slice %16 {offsets = [96, 0], sizes = [8, 128], strides = [1, 1]} : vector<128x128xi32> to vector<8x128xi32>
    %66 = arith.addi %62, %65 : vector<8x128xi32>
    %67 = vector.extract_strided_slice %12 {offsets = [104, 0], sizes = [8, 128], strides = [1, 1]} : vector<128x128xf32> to vector<8x128xf32>
    %68 = arith.addf %64, %67 : vector<8x128xf32>
    %69 = vector.extract_strided_slice %16 {offsets = [104, 0], sizes = [8, 128], strides = [1, 1]} : vector<128x128xi32> to vector<8x128xi32>
    %70 = arith.addi %66, %69 : vector<8x128xi32>
    %71 = vector.extract_strided_slice %12 {offsets = [112, 0], sizes = [8, 128], strides = [1, 1]} : vector<128x128xf32> to vector<8x128xf32>
    %72 = arith.addf %68, %71 : vector<8x128xf32>
    %73 = vector.extract_strided_slice %16 {offsets = [112, 0], sizes = [8, 128], strides = [1, 1]} : vector<128x128xi32> to vector<8x128xi32>
    %74 = arith.addi %70, %73 : vector<8x128xi32>
    %75 = vector.extract_strided_slice %12 {offsets = [120, 0], sizes = [8, 128], strides = [1, 1]} : vector<128x128xf32> to vector<8x128xf32>
    %76 = arith.addf %72, %75 : vector<8x128xf32>
    %77 = vector.extract_strided_slice %16 {offsets = [120, 0], sizes = [8, 128], strides = [1, 1]} : vector<128x128xi32> to vector<8x128xi32>
    %78 = arith.addi %74, %77 : vector<8x128xi32>
    %c0_7 = arith.constant 0 : index
    %c0_8 = arith.constant 0 : index
    %79 = vector.load %arg4[%c0_7, %c0_8] : memref<8x128xf32, #tpu.memory_space<vmem>>, vector<8x128xf32>
    %80 = arith.addf %79, %76 : vector<8x128xf32>
    %c0_9 = arith.constant 0 : index
    %c0_10 = arith.constant 0 : index
    %81 = vector.load %arg4[%c0_9, %c0_10] : memref<8x128xf32, #tpu.memory_space<vmem>>, vector<8x128xf32>
    tpu.vector_store %arg4[%c0_9, %c0_10], %80 {strides = array<i32>} : memref<8x128xf32, #tpu.memory_space<vmem>>, vector<8x128xf32>,
    %c0_11 = arith.constant 0 : index
    %c0_12 = arith.constant 0 : index
    %82 = vector.load %arg5[%c0_11, %c0_12] : memref<8x128xi32, #tpu.memory_space<vmem>>, vector<8x128xi32>
    %83 = arith.addi %82, %78 : vector<8x128xi32>
    %c0_13 = arith.constant 0 : index
    %c0_14 = arith.constant 0 : index
    %84 = vector.load %arg5[%c0_13, %c0_14] : memref<8x128xi32, #tpu.memory_space<vmem>>, vector<8x128xi32>
    tpu.vector_store %arg5[%c0_13, %c0_14], %83 {strides = array<i32>} : memref<8x128xi32, #tpu.memory_space<vmem>>, vector<8x128xi32>,
    return
  }
  func.func @transform_0(%arg0: i32, %arg1: i32) -> (i32, i32) {
    %c0_i32 = arith.constant 0 : i32
    return %arg0, %arg1 : i32, i32
  }
  func.func @transform_1(%arg0: i32, %arg1: i32) -> (i32, i32) {
    %c0_i32 = arith.constant 0 : i32
    %c0_i32_0 = arith.constant 0 : i32
    return %arg0, %c0_i32 : i32, i32
  }
  func.func @transform_2(%arg0: i32, %arg1: i32) -> (i32, i32) {
    %c0_i32 = arith.constant 0 : i32
    %c0_i32_0 = arith.constant 0 : i32
    return %arg0, %c0_i32 : i32, i32
  }
  func.func @transform_3(%arg0: i32, %arg1: i32) -> (i32, i32) {
    %c0_i32 = arith.constant 0 : i32
    %c0_i32_0 = arith.constant 0 : i32
    return %arg0, %c0_i32 : i32, i32
  }
}

</mosaic_0001>

<llo_original>
// kernel: tpu_custom_call.1
$region0: #{tpu_custom_call.1}
  #allocation0 [shape = 'u32[]', space=smem, size = 0x4, offset = 0x4, fixed_abs, tag = 'smem constant byte address 0x4 - core index']
  #allocation1 [shape = 'u32[144,128]{1,0:T(1,128)}', space=vmem, size = 0x12000, scoped, tag = 'internal scratch']
  %s0 = inlined_call_operand.hbm [shape: f32[16,128], index: 0, kind: input, shape index: {}]
  %s1 = inlined_call_operand.hbm [shape: f32[16,128], index: 1, kind: input, shape index: {}]
  %s2 = inlined_call_operand.hbm [shape: f32[8,128], index: 2, kind: output, shape index: {0}]
  %s3 = inlined_call_operand.hbm [shape: s32[8,128], index: 3, kind: output, shape index: {1}]
  %4 = xla_tuple %s2, %s3
  %s5 = sld [smem:[#allocation0]]
  $region38: #{tpu_custom_call.1} parent=0
    _
  %s7 = ssub.s32 1, %s5
  %s8 = scalar_select 0, %s7, %s5
  $region1: #{tpu_custom_call.1} parent=0
    #allocation2 [shape = 'u8[8192]{0}', space=vmem, size = 0x2000, scoped, tag = 'input window, operand 0, single buffered']
    #allocation3 [shape = 's32[1]{0}', space=sflag, size = 0x4, scoped, tag = 'scoped memory for tpu_custom_call.1']
    #allocation4 [shape = 's32[1]{0}', space=sflag, size = 0x4, scoped, tag = 'scoped memory for tpu_custom_call.1']
    #allocation5 [shape = 'u8[8192]{0}', space=vmem, size = 0x2000, scoped, tag = 'input window, operand 1, single buffered']
    #allocation6 [shape = 's32[1]{0}', space=sflag, size = 0x4, scoped, tag = 'scoped memory for tpu_custom_call.1']
    #allocation7 [shape = 'u8[4096]{0}', space=vmem, size = 0x1000, scoped, tag = 'output window, operand 0, single buffered']
    #allocation8 [shape = 'u8[4096]{0}', space=vmem, size = 0x1000, scoped, tag = 'output window, operand 1, single buffered']
    #allocation9 [shape = 's32[1]{0}', space=sflag, size = 0x4, scoped, tag = 'scoped memory for tpu_custom_call.1']
    %9 = vsyncpa [#allocation3], 0
    %10 = vsyncpa [#allocation6], 0
    %11 = vsyncpa [#allocation4], 0
    %12 = vsyncpa [#allocation9], 0
    // Predicated region
    $region2: #{tpu_custom_call.1} parent=1 // pred_check
      _
    $region3: #{tpu_custom_call.1} parent=1 // pred_check_branch
      %14 = sbr.rel (0) target = $region5
    $region4: #{tpu_custom_call.1} parent=1 // pred_region
      %s16 = ssub.s32 256, 256
      %17 = vsyncadd [#allocation3], %s16
      %s18 = sshll.u32 [#allocation2], 4
      %s19 = int_to_ptr.vmem [resolvable:$true] %s18
      %24 = dma.hbm_to_vmem [thread:$0]  %s0, 256, %s19, [#allocation3], 128, 128, 8
    $region5: #{tpu_custom_call.1} parent=1 // pred_fallthru
      _
    // Predicated region
    $region6: #{tpu_custom_call.1} parent=1 // pred_check
      _
    $region7: #{tpu_custom_call.1} parent=1 // pred_check_branch
      %26 = sbr.rel (0) target = $region9
    $region8: #{tpu_custom_call.1} parent=1 // pred_region
      %s28 = ssub.s32 256, 256
      %29 = vsyncadd [#allocation6], %s28
      %s30 = sshll.u32 [#allocation5], 4
      %s31 = int_to_ptr.vmem [resolvable:$true] %s30
      %36 = dma.hbm_to_vmem [thread:$0]  %s1, 256, %s31, [#allocation6], 128, 128, 8
    $region9: #{tpu_custom_call.1} parent=1 // pred_fallthru
      _
    // Predicated region
    $region10: #{tpu_custom_call.1} parent=1 // pred_check
      _
    $region11: #{tpu_custom_call.1} parent=1 // pred_check_branch
      %38 = sbr.rel (0) target = $region13
    $region12: #{tpu_custom_call.1} parent=1 // pred_region
      %39 = dma.done [#allocation3], 256
    $region13: #{tpu_custom_call.1} parent=1 // pred_fallthru
      _
    // Predicated region
    $region14: #{tpu_custom_call.1} parent=1 // pred_check
      _
    $region15: #{tpu_custom_call.1} parent=1 // pred_check_branch
      %41 = sbr.rel (0) target = $region17
    $region16: #{tpu_custom_call.1} parent=1 // pred_region
      %42 = dma.done [#allocation6], 256
    $region17: #{tpu_custom_call.1} parent=1 // pred_fallthru
      _
    %p43 = scmp.eq.s32.totalorder 0, 0
    // Predicated region
    $region18: #{tpu_custom_call.1} parent=1 // pred_check
      %p44 = pneg %p43
    $region19: #{tpu_custom_call.1} parent=1 // pred_check_branch
      %46 = sbr.rel (%p44) target = $region21
    $region20: #{tpu_custom_call.1} parent=1 // pred_region
      %47 = vst [vmem:[#allocation7] sm:$0xff] 0.0
      %48 = vst [vmem:[#allocation8] sm:$0xff] 0
    $region21: #{tpu_custom_call.1} parent=1 // pred_fallthru
      _
    %v49 = vld [vmem:[#allocation2] sm:$0xff]
    %v50 = vld [vmem:[#allocation2 + $0x8] sm:$0xff]
    %v51 = vld [vmem:[#allocation5] sm:$0xff]
    %v52 = vld [vmem:[#allocation5 + $0x8] sm:$0xff]
    %v53 = vlaneseq
    %v54 = vshrl.u32 %v53, 7
    %v55 = vsub.s32 0, %v54
    %v56 = vrot.slane %v49, %v55
    %58 = vbcast.lane.b32.xlu0 %v56, 256
    %v59 = vpop.permute.xlu0 %58
    %s61 = sor.u32 256, 8
    %62 = vbcast.lane.b32.xlu0 %v56, %s61
    %v63 = vpop.permute.xlu0 %62
    %s65 = sor.u32 256, 16
    %66 = vbcast.lane.b32.xlu0 %v56, %s65
    %v67 = vpop.permute.xlu0 %66
    %s69 = sor.u32 256, 24
    %70 = vbcast.lane.b32.xlu0 %v56, %s69
    %v71 = vpop.permute.xlu0 %70
    %s73 = sor.u32 256, 32
    %74 = vbcast.lane.b32.xlu0 %v56, %s73
    %v75 = vpop.permute.xlu0 %74
    %s77 = sor.u32 256, 40
    %78 = vbcast.lane.b32.xlu0 %v56, %s77
    %v79 = vpop.permute.xlu0 %78
    %s81 = sor.u32 256, 48
    %82 = vbcast.lane.b32.xlu0 %v56, %s81
    %v83 = vpop.permute.xlu0 %82
    %s85 = sor.u32 256, 56
    %86 = vbcast.lane.b32.xlu0 %v56, %s85
    %v87 = vpop.permute.xlu0 %86
    %s89 = sor.u32 256, 64
    %90 = vbcast.lane.b32.xlu0 %v56, %s89
    %v91 = vpop.permute.xlu0 %90
    %s93 = sor.u32 256, 72
    %94 = vbcast.lane.b32.xlu0 %v56, %s93
    %v95 = vpop.permute.xlu0 %94
    %s97 = sor.u32 256, 80
    %98 = vbcast.lane.b32.xlu0 %v56, %s97
    %v99 = vpop.permute.xlu0 %98
    %s101 = sor.u32 256, 88
    %102 = vbcast.lane.b32.xlu0 %v56, %s101
    %v103 = vpop.permute.xlu0 %102
    %s105 = sor.u32 256, 96
    %106 = vbcast.lane.b32.xlu0 %v56, %s105
    %v107 = vpop.permute.xlu0 %106
    %s109 = sor.u32 256, 104
    %110 = vbcast.lane.b32.xlu0 %v56, %s109
    %v111 = vpop.permute.xlu0 %110
    %s113 = sor.u32 256, 112
    %114 = vbcast.lane.b32.xlu0 %v56, %s113
    %v115 = vpop.permute.xlu0 %114
    %s117 = sor.u32 256, 120
    %118 = vbcast.lane.b32.xlu0 %v56, %s117
    %v119 = vpop.permute.xlu0 %118
    %v120 = vlaneseq
    %v121 = vshrl.u32 %v120, 7
    %v122 = vsub.s32 1, %v121
    %v123 = vrot.slane %v49, %v122
    %125 = vbcast.lane.b32.xlu0 %v123, 256
    %v126 = vpop.permute.xlu0 %125
    %s128 = sor.u32 256, 8
    %129 = vbcast.lane.b32.xlu0 %v123, %s128
    %v130 = vpop.permute.xlu0 %129
    %s132 = sor.u32 256, 16
    %133 = vbcast.lane.b32.xlu0 %v123, %s132
    %v134 = vpop.permute.xlu0 %133
    %s136 = sor.u32 256, 24
    %137 = vbcast.lane.b32.xlu0 %v123, %s136
    %v138 = vpop.permute.xlu0 %137
    %s140 = sor.u32 256, 32
    %141 = vbcast.lane.b32.xlu0 %v123, %s140
    %v142 = vpop.permute.xlu0 %141
    %s144 = sor.u32 256, 40
    %145 = vbcast.lane.b32.xlu0 %v123, %s144
    %v146 = vpop.permute.xlu0 %145
    %s148 = sor.u32 256, 48
    %149 = vbcast.lane.b32.xlu0 %v123, %s148
    %v150 = vpop.permute.xlu0 %149
    %s152 = sor.u32 256, 56
    %153 = vbcast.lane.b32.xlu0 %v123, %s152
    %v154 = vpop.permute.xlu0 %153
    %s156 = sor.u32 256, 64
    %157 = vbcast.lane.b32.xlu0 %v123, %s156
    %v158 = vpop.permute.xlu0 %157
    %s160 = sor.u32 256, 72
    %161 = vbcast.lane.b32.xlu0 %v123, %s160
    %v162 = vpop.permute.xlu0 %161
    %s164 = sor.u32 256, 80
    %165 = vbcast.lane.b32.xlu0 %v123, %s164
    %v166 = vpop.permute.xlu0 %165
    %s168 = sor.u32 256, 88
    %169 = vbcast.lane.b32.xlu0 %v123, %s168
    %v170 = vpop.permute.xlu0 %169
    %s172 = sor.u32 256, 96
    %173 = vbcast.lane.b32.xlu0 %v123, %s172
    %v174 = vpop.permute.xlu0 %173
    %s176 = sor.u32 256, 104
    %177 = vbcast.lane.b32.xlu0 %v123, %s176
    %v178 = vpop.permute.xlu0 %177
    %s180 = sor.u32 256, 112
    %181 = vbcast.lane.b32.xlu0 %v123, %s180
    %v182 = vpop.permute.xlu0 %181
    %s184 = sor.u32 256, 120
    %185 = vbcast.lane.b32.xlu0 %v123, %s184
    %v186 = vpop.permute.xlu0 %185
    %v187 = vlaneseq
    %v188 = vshrl.u32 %v187, 7
    %v189 = vsub.s32 2, %v188
    %v190 = vrot.slane %v49, %v189
    %192 = vbcast.lane.b32.xlu0 %v190, 256
    %v193 = vpop.permute.xlu0 %192
    %s195 = sor.u32 256, 8
    %196 = vbcast.lane.b32.xlu0 %v190, %s195
    %v197 = vpop.permute.xlu0 %196
    %s199 = sor.u32 256, 16
    %200 = vbcast.lane.b32.xlu0 %v190, %s199
    %v201 = vpop.permute.xlu0 %200
    %s203 = sor.u32 256, 24
    %204 = vbcast.lane.b32.xlu0 %v190, %s203
    %v205 = vpop.permute.xlu0 %204
    %s207 = sor.u32 256, 32
    %208 = vbcast.lane.b32.xlu0 %v190, %s207
    %v209 = vpop.permute.xlu0 %208
    %s211 = sor.u32 256, 40
    %212 = vbcast.lane.b32.xlu0 %v190, %s211
    %v213 = vpop.permute.xlu0 %212
    %s215 = sor.u32 256, 48
    %216 = vbcast.lane.b32.xlu0 %v190, %s215
    %v217 = vpop.permute.xlu0 %216
    %s219 = sor.u32 256, 56
    %220 = vbcast.lane.b32.xlu0 %v190, %s219
    %v221 = vpop.permute.xlu0 %220
    %s223 = sor.u32 256, 64
    %224 = vbcast.lane.b32.xlu0 %v190, %s223
    %v225 = vpop.permute.xlu0 %224
    %s227 = sor.u32 256, 72
    %228 = vbcast.lane.b32.xlu0 %v190, %s227
    %v229 = vpop.permute.xlu0 %228
    %s231 = sor.u32 256, 80
    %232 = vbcast.lane.b32.xlu0 %v190, %s231
    %v233 = vpop.permute.xlu0 %232
    %s235 = sor.u32 256, 88
    %236 = vbcast.lane.b32.xlu0 %v190, %s235
    %v237 = vpop.permute.xlu0 %236
    %s239 = sor.u32 256, 96
    %240 = vbcast.lane.b32.xlu0 %v190, %s239
    %v241 = vpop.permute.xlu0 %240
    %s243 = sor.u32 256, 104
    %244 = vbcast.lane.b32.xlu0 %v190, %s243
    %v245 = vpop.permute.xlu0 %244
    %s247 = sor.u32 256, 112
    %248 = vbcast.lane.b32.xlu0 %v190, %s247
    %v249 = vpop.permute.xlu0 %248
    %s251 = sor.u32 256, 120
    %252 = vbcast.lane.b32.xlu0 %v190, %s251
    %v253 = vpop.permute.xlu0 %252
    %v254 = vlaneseq
    %v255 = vshrl.u32 %v254, 7
    %v256 = vsub.s32 3, %v255
    %v257 = vrot.slane %v49, %v256
    %259 = vbcast.lane.b32.xlu0 %v257, 256
    %v260 = vpop.permute.xlu0 %259
    %s262 = sor.u32 256, 8
    %263 = vbcast.lane.b32.xlu0 %v257, %s262
    %v264 = vpop.permute.xlu0 %263
    %s266 = sor.u32 256, 16
    %267 = vbcast.lane.b32.xlu0 %v257, %s266
    %v268 = vpop.permute.xlu0 %267
    %s270 = sor.u32 256, 24
    %271 = vbcast.lane.b32.xlu0 %v257, %s270
    %v272 = vpop.permute.xlu0 %271
    %s274 = sor.u32 256, 32
    %275 = vbcast.lane.b32.xlu0 %v257, %s274
    %v276 = vpop.permute.xlu0 %275
    %s278 = sor.u32 256, 40
    %279 = vbcast.lane.b32.xlu0 %v257, %s278
    %v280 = vpop.permute.xlu0 %279
    %s282 = sor.u32 256, 48
    %283 = vbcast.lane.b32.xlu0 %v257, %s282
    %v284 = vpop.permute.xlu0 %283
    %s286 = sor.u32 256, 56
    %287 = vbcast.lane.b32.xlu0 %v257, %s286
    %v288 = vpop.permute.xlu0 %287
    %s290 = sor.u32 256, 64
    %291 = vbcast.lane.b32.xlu0 %v257, %s290
    %v292 = vpop.permute.xlu0 %291
    %s294 = sor.u32 256, 72
    %295 = vbcast.lane.b32.xlu0 %v257, %s294
    %v296 = vpop.permute.xlu0 %295
    %s298 = sor.u32 256, 80
    %299 = vbcast.lane.b32.xlu0 %v257, %s298
    %v300 = vpop.permute.xlu0 %299
    %s302 = sor.u32 256, 88
    %303 = vbcast.lane.b32.xlu0 %v257, %s302
    %v304 = vpop.permute.xlu0 %303
    %s306 = sor.u32 256, 96
    %307 = vbcast.lane.b32.xlu0 %v257, %s306
    %v308 = vpop.permute.xlu0 %307
    %s310 = sor.u32 256, 104
    %311 = vbcast.lane.b32.xlu0 %v257, %s310
    %v312 = vpop.permute.xlu0 %311
    %s314 = sor.u32 256, 112
    %315 = vbcast.lane.b32.xlu0 %v257, %s314
    %v316 = vpop.permute.xlu0 %315
    %s318 = sor.u32 256, 120
    %319 = vbcast.lane.b32.xlu0 %v257, %s318
    %v320 = vpop.permute.xlu0 %319
    %v321 = vlaneseq
    %v322 = vshrl.u32 %v321, 7
    %v323 = vsub.s32 4, %v322
    %v324 = vrot.slane %v49, %v323
    %326 = vbcast.lane.b32.xlu0 %v324, 256
    %v327 = vpop.permute.xlu0 %326
    %s329 = sor.u32 256, 8
    %330 = vbcast.lane.b32.xlu0 %v324, %s329
    %v331 = vpop.permute.xlu0 %330
    %s333 = sor.u32 256, 16
    %334 = vbcast.lane.b32.xlu0 %v324, %s333
    %v335 = vpop.permute.xlu0 %334
    %s337 = sor.u32 256, 24
    %338 = vbcast.lane.b32.xlu0 %v324, %s337
    %v339 = vpop.permute.xlu0 %338
    %s341 = sor.u32 256, 32
    %342 = vbcast.lane.b32.xlu0 %v324, %s341
    %v343 = vpop.permute.xlu0 %342
    %s345 = sor.u32 256, 40
    %346 = vbcast.lane.b32.xlu0 %v324, %s345
    %v347 = vpop.permute.xlu0 %346
    %s349 = sor.u32 256, 48
    %350 = vbcast.lane.b32.xlu0 %v324, %s349
    %v351 = vpop.permute.xlu0 %350
    %s353 = sor.u32 256, 56
    %354 = vbcast.lane.b32.xlu0 %v324, %s353
    %v355 = vpop.permute.xlu0 %354
    %s357 = sor.u32 256, 64
    %358 = vbcast.lane.b32.xlu0 %v324, %s357
    %v359 = vpop.permute.xlu0 %358
    %s361 = sor.u32 256, 72
    %362 = vbcast.lane.b32.xlu0 %v324, %s361
    %v363 = vpop.permute.xlu0 %362
    %s365 = sor.u32 256, 80
    %366 = vbcast.lane.b32.xlu0 %v324, %s365
    %v367 = vpop.permute.xlu0 %366
    %s369 = sor.u32 256, 88
    %370 = vbcast.lane.b32.xlu0 %v324, %s369
    %v371 = vpop.permute.xlu0 %370
    %s373 = sor.u32 256, 96
    %374 = vbcast.lane.b32.xlu0 %v324, %s373
    %v375 = vpop.permute.xlu0 %374
    %s377 = sor.u32 256, 104
    %378 = vbcast.lane.b32.xlu0 %v324, %s377
    %v379 = vpop.permute.xlu0 %378
    %s381 = sor.u32 256, 112
    %382 = vbcast.lane.b32.xlu0 %v324, %s381
    %v383 = vpop.permute.xlu0 %382
    %s385 = sor.u32 256, 120
    %386 = vbcast.lane.b32.xlu0 %v324, %s385
    %v387 = vpop.permute.xlu0 %386
    %v388 = vlaneseq
    %v389 = vshrl.u32 %v388, 7
    %v390 = vsub.s32 5, %v389
    %v391 = vrot.slane %v49, %v390
    %393 = vbcast.lane.b32.xlu0 %v391, 256
    %v394 = vpop.permute.xlu0 %393
    %s396 = sor.u32 256, 8
    %397 = vbcast.lane.b32.xlu0 %v391, %s396
    %v398 = vpop.permute.xlu0 %397
    %s400 = sor.u32 256, 16
    %401 = vbcast.lane.b32.xlu0 %v391, %s400
    %v402 = vpop.permute.xlu0 %401
    %s404 = sor.u32 256, 24
    %405 = vbcast.lane.b32.xlu0 %v391, %s404
    %v406 = vpop.permute.xlu0 %405
    %s408 = sor.u32 256, 32
    %409 = vbcast.lane.b32.xlu0 %v391, %s408
    %v410 = vpop.permute.xlu0 %409
    %s412 = sor.u32 256, 40
    %413 = vbcast.lane.b32.xlu0 %v391, %s412
    %v414 = vpop.permute.xlu0 %413
    %s416 = sor.u32 256, 48
    %417 = vbcast.lane.b32.xlu0 %v391, %s416
    %v418 = vpop.permute.xlu0 %417
    %s420 = sor.u32 256, 56
    %421 = vbcast.lane.b32.xlu0 %v391, %s420
    %v422 = vpop.permute.xlu0 %421
    %s424 = sor.u32 256, 64
    %425 = vbcast.lane.b32.xlu0 %v391, %s424
    %v426 = vpop.permute.xlu0 %425
    %s428 = sor.u32 256, 72
    %429 = vbcast.lane.b32.xlu0 %v391, %s428
    %v430 = vpop.permute.xlu0 %429
    %s432 = sor.u32 256, 80
    %433 = vbcast.lane.b32.xlu0 %v391, %s432
    %v434 = vpop.permute.xlu0 %433
    %s436 = sor.u32 256, 88
    %437 = vbcast.lane.b32.xlu0 %v391, %s436
    %v438 = vpop.permute.xlu0 %437
    %s440 = sor.u32 256, 96
    %441 = vbcast.lane.b32.xlu0 %v391, %s440
    %v442 = vpop.permute.xlu0 %441
    %s444 = sor.u32 256, 104
    %445 = vbcast.lane.b32.xlu0 %v391, %s444
    %v446 = vpop.permute.xlu0 %445
    %s448 = sor.u32 256, 112
    %449 = vbcast.lane.b32.xlu0 %v391, %s448
    %v450 = vpop.permute.xlu0 %449
    %s452 = sor.u32 256, 120
    %453 = vbcast.lane.b32.xlu0 %v391, %s452
    %v454 = vpop.permute.xlu0 %453
    %v455 = vlaneseq
    %v456 = vshrl.u32 %v455, 7
    %v457 = vsub.s32 6, %v456
    %v458 = vrot.slane %v49, %v457
    %460 = vbcast.lane.b32.xlu0 %v458, 256
    %v461 = vpop.permute.xlu0 %460
    %s463 = sor.u32 256, 8
    %464 = vbcast.lane.b32.xlu0 %v458, %s463
    %v465 = vpop.permute.xlu0 %464
    %s467 = sor.u32 256, 16
    %468 = vbcast.lane.b32.xlu0 %v458, %s467
    %v469 = vpop.permute.xlu0 %468
    %s471 = sor.u32 256, 24
    %472 = vbcast.lane.b32.xlu0 %v458, %s471
    %v473 = vpop.permute.xlu0 %472
    %s475 = sor.u32 256, 32
    %476 = vbcast.lane.b32.xlu0 %v458, %s475
    %v477 = vpop.permute.xlu0 %476
    %s479 = sor.u32 256, 40
    %480 = vbcast.lane.b32.xlu0 %v458, %s479
    %v481 = vpop.permute.xlu0 %480
    %s483 = sor.u32 256, 48
    %484 = vbcast.lane.b32.xlu0 %v458, %s483
    %v485 = vpop.permute.xlu0 %484
    %s487 = sor.u32 256, 56
    %488 = vbcast.lane.b32.xlu0 %v458, %s487
    %v489 = vpop.permute.xlu0 %488
    %s491 = sor.u32 256, 64
    %492 = vbcast.lane.b32.xlu0 %v458, %s491
    %v493 = vpop.permute.xlu0 %492
    %s495 = sor.u32 256, 72
    %496 = vbcast.lane.b32.xlu0 %v458, %s495
    %v497 = vpop.permute.xlu0 %496
    %s499 = sor.u32 256, 80
    %500 = vbcast.lane.b32.xlu0 %v458, %s499
    %v501 = vpop.permute.xlu0 %500
    %s503 = sor.u32 256, 88
    %504 = vbcast.lane.b32.xlu0 %v458, %s503
    %v505 = vpop.permute.xlu0 %504
    %s507 = sor.u32 256, 96
    %508 = vbcast.lane.b32.xlu0 %v458, %s507
    %v509 = vpop.permute.xlu0 %508
    %s511 = sor.u32 256, 104
    %512 = vbcast.lane.b32.xlu0 %v458, %s511
    %v513 = vpop.permute.xlu0 %512
    %s515 = sor.u32 256, 112
    %516 = vbcast.lane.b32.xlu0 %v458, %s515
    %v517 = vpop.permute.xlu0 %516
    %s519 = sor.u32 256, 120
    %520 = vbcast.lane.b32.xlu0 %v458, %s519
    %v521 = vpop.permute.xlu0 %520
    %v522 = vlaneseq
    %v523 = vshrl.u32 %v522, 7
    %v524 = vsub.s32 7, %v523
    %v525 = vrot.slane %v49, %v524
    %527 = vbcast.lane.b32.xlu0 %v525, 256
    %v528 = vpop.permute.xlu0 %527
    %s530 = sor.u32 256, 8
    %531 = vbcast.lane.b32.xlu0 %v525, %s530
    %v532 = vpop.permute.xlu0 %531
    %s534 = sor.u32 256, 16
    %535 = vbcast.lane.b32.xlu0 %v525, %s534
    %v536 = vpop.permute.xlu0 %535
    %s538 = sor.u32 256, 24
    %539 = vbcast.lane.b32.xlu0 %v525, %s538
    %v540 = vpop.permute.xlu0 %539
    %s542 = sor.u32 256, 32
    %543 = vbcast.lane.b32.xlu0 %v525, %s542
    %v544 = vpop.permute.xlu0 %543
    %s546 = sor.u32 256, 40
    %547 = vbcast.lane.b32.xlu0 %v525, %s546
    %v548 = vpop.permute.xlu0 %547
    %s550 = sor.u32 256, 48
    %551 = vbcast.lane.b32.xlu0 %v525, %s550
    %v552 = vpop.permute.xlu0 %551
    %s554 = sor.u32 256, 56
    %555 = vbcast.lane.b32.xlu0 %v525, %s554
    %v556 = vpop.permute.xlu0 %555
    %s558 = sor.u32 256, 64
    %559 = vbcast.lane.b32.xlu0 %v525, %s558
    %v560 = vpop.permute.xlu0 %559
    %s562 = sor.u32 256, 72
    %563 = vbcast.lane.b32.xlu0 %v525, %s562
    %v564 = vpop.permute.xlu0 %563
    %s566 = sor.u32 256, 80
    %567 = vbcast.lane.b32.xlu0 %v525, %s566
    %v568 = vpop.permute.xlu0 %567
    %s570 = sor.u32 256, 88
    %571 = vbcast.lane.b32.xlu0 %v525, %s570
    %v572 = vpop.permute.xlu0 %571
    %s574 = sor.u32 256, 96
    %575 = vbcast.lane.b32.xlu0 %v525, %s574
    %v576 = vpop.permute.xlu0 %575
    %s578 = sor.u32 256, 104
    %579 = vbcast.lane.b32.xlu0 %v525, %s578
    %v580 = vpop.permute.xlu0 %579
    %s582 = sor.u32 256, 112
    %583 = vbcast.lane.b32.xlu0 %v525, %s582
    %v584 = vpop.permute.xlu0 %583
    %s586 = sor.u32 256, 120
    %587 = vbcast.lane.b32.xlu0 %v525, %s586
    %v588 = vpop.permute.xlu0 %587
    %v589 = vlaneseq
    %v590 = vshrl.u32 %v589, 7
    %v591 = vsub.s32 0, %v590
    %v592 = vrot.slane %v50, %v591
    %594 = vbcast.lane.b32.xlu0 %v592, 256
    %v595 = vpop.permute.xlu0 %594
    %s597 = sor.u32 256, 8
    %598 = vbcast.lane.b32.xlu0 %v592, %s597
    %v599 = vpop.permute.xlu0 %598
    %s601 = sor.u32 256, 16
    %602 = vbcast.lane.b32.xlu0 %v592, %s601
    %v603 = vpop.permute.xlu0 %602
    %s605 = sor.u32 256, 24
    %606 = vbcast.lane.b32.xlu0 %v592, %s605
    %v607 = vpop.permute.xlu0 %606
    %s609 = sor.u32 256, 32
    %610 = vbcast.lane.b32.xlu0 %v592, %s609
    %v611 = vpop.permute.xlu0 %610
    %s613 = sor.u32 256, 40
    %614 = vbcast.lane.b32.xlu0 %v592, %s613
    %v615 = vpop.permute.xlu0 %614
    %s617 = sor.u32 256, 48
    %618 = vbcast.lane.b32.xlu0 %v592, %s617
    %v619 = vpop.permute.xlu0 %618
    %s621 = sor.u32 256, 56
    %622 = vbcast.lane.b32.xlu0 %v592, %s621
    %v623 = vpop.permute.xlu0 %622
    %s625 = sor.u32 256, 64
    %626 = vbcast.lane.b32.xlu0 %v592, %s625
    %v627 = vpop.permute.xlu0 %626
    %s629 = sor.u32 256, 72
    %630 = vbcast.lane.b32.xlu0 %v592, %s629
    %v631 = vpop.permute.xlu0 %630
    %s633 = sor.u32 256, 80
    %634 = vbcast.lane.b32.xlu0 %v592, %s633
    %v635 = vpop.permute.xlu0 %634
    %s637 = sor.u32 256, 88
    %638 = vbcast.lane.b32.xlu0 %v592, %s637
    %v639 = vpop.permute.xlu0 %638
    %s641 = sor.u32 256, 96
    %642 = vbcast.lane.b32.xlu0 %v592, %s641
    %v643 = vpop.permute.xlu0 %642
    %s645 = sor.u32 256, 104
    %646 = vbcast.lane.b32.xlu0 %v592, %s645
    %v647 = vpop.permute.xlu0 %646
    %s649 = sor.u32 256, 112
    %650 = vbcast.lane.b32.xlu0 %v592, %s649
    %v651 = vpop.permute.xlu0 %650
    %s653 = sor.u32 256, 120
    %654 = vbcast.lane.b32.xlu0 %v592, %s653
    %v655 = vpop.permute.xlu0 %654
    %v656 = vlaneseq
    %v657 = vshrl.u32 %v656, 7
    %v658 = vsub.s32 1, %v657
    %v659 = vrot.slane %v50, %v658
    %661 = vbcast.lane.b32.xlu0 %v659, 256
    %v662 = vpop.permute.xlu0 %661
    %s664 = sor.u32 256, 8
    %665 = vbcast.lane.b32.xlu0 %v659, %s664
    %v666 = vpop.permute.xlu0 %665
    %s668 = sor.u32 256, 16
    %669 = vbcast.lane.b32.xlu0 %v659, %s668
    %v670 = vpop.permute.xlu0 %669
    %s672 = sor.u32 256, 24
    %673 = vbcast.lane.b32.xlu0 %v659, %s672
    %v674 = vpop.permute.xlu0 %673
    %s676 = sor.u32 256, 32
    %677 = vbcast.lane.b32.xlu0 %v659, %s676
    %v678 = vpop.permute.xlu0 %677
    %s680 = sor.u32 256, 40
    %681 = vbcast.lane.b32.xlu0 %v659, %s680
    %v682 = vpop.permute.xlu0 %681
    %s684 = sor.u32 256, 48
    %685 = vbcast.lane.b32.xlu0 %v659, %s684
    %v686 = vpop.permute.xlu0 %685
    %s688 = sor.u32 256, 56
    %689 = vbcast.lane.b32.xlu0 %v659, %s688
    %v690 = vpop.permute.xlu0 %689
    %s692 = sor.u32 256, 64
    %693 = vbcast.lane.b32.xlu0 %v659, %s692
    %v694 = vpop.permute.xlu0 %693
    %s696 = sor.u32 256, 72
    %697 = vbcast.lane.b32.xlu0 %v659, %s696
    %v698 = vpop.permute.xlu0 %697
    %s700 = sor.u32 256, 80
    %701 = vbcast.lane.b32.xlu0 %v659, %s700
    %v702 = vpop.permute.xlu0 %701
    %s704 = sor.u32 256, 88
    %705 = vbcast.lane.b32.xlu0 %v659, %s704
    %v706 = vpop.permute.xlu0 %705
    %s708 = sor.u32 256, 96
    %709 = vbcast.lane.b32.xlu0 %v659, %s708
    %v710 = vpop.permute.xlu0 %709
    %s712 = sor.u32 256, 104
    %713 = vbcast.lane.b32.xlu0 %v659, %s712
    %v714 = vpop.permute.xlu0 %713
    %s716 = sor.u32 256, 112
    %717 = vbcast.lane.b32.xlu0 %v659, %s716
    %v718 = vpop.permute.xlu0 %717
    %s720 = sor.u32 256, 120
    %721 = vbcast.lane.b32.xlu0 %v659, %s720
    %v722 = vpop.permute.xlu0 %721
    %v723 = vlaneseq
    %v724 = vshrl.u32 %v723, 7
    %v725 = vsub.s32 2, %v724
    %v726 = vrot.slane %v50, %v725
    %728 = vbcast.lane.b32.xlu0 %v726, 256
    %v729 = vpop.permute.xlu0 %728
    %s731 = sor.u32 256, 8
    %732 = vbcast.lane.b32.xlu0 %v726, %s731
    %v733 = vpop.permute.xlu0 %732
    %s735 = sor.u32 256, 16
    %736 = vbcast.lane.b32.xlu0 %v726, %s735
    %v737 = vpop.permute.xlu0 %736
    %s739 = sor.u32 256, 24
    %740 = vbcast.lane.b32.xlu0 %v726, %s739
    %v741 = vpop.permute.xlu0 %740
    %s743 = sor.u32 256, 32
    %744 = vbcast.lane.b32.xlu0 %v726, %s743
    %v745 = vpop.permute.xlu0 %744
    %s747 = sor.u32 256, 40
    %748 = vbcast.lane.b32.xlu0 %v726, %s747
    %v749 = vpop.permute.xlu0 %748
    %s751 = sor.u32 256, 48
    %752 = vbcast.lane.b32.xlu0 %v726, %s751
    %v753 = vpop.permute.xlu0 %752
    %s755 = sor.u32 256, 56
    %756 = vbcast.lane.b32.xlu0 %v726, %s755
    %v757 = vpop.permute.xlu0 %756
    %s759 = sor.u32 256, 64
    %760 = vbcast.lane.b32.xlu0 %v726, %s759
    %v761 = vpop.permute.xlu0 %760
    %s763 = sor.u32 256, 72
    %764 = vbcast.lane.b32.xlu0 %v726, %s763
    %v765 = vpop.permute.xlu0 %764
    %s767 = sor.u32 256, 80
    %768 = vbcast.lane.b32.xlu0 %v726, %s767
    %v769 = vpop.permute.xlu0 %768
    %s771 = sor.u32 256, 88
    %772 = vbcast.lane.b32.xlu0 %v726, %s771
    %v773 = vpop.permute.xlu0 %772
    %s775 = sor.u32 256, 96
    %776 = vbcast.lane.b32.xlu0 %v726, %s775
    %v777 = vpop.permute.xlu0 %776
    %s779 = sor.u32 256, 104
    %780 = vbcast.lane.b32.xlu0 %v726, %s779
    %v781 = vpop.permute.xlu0 %780
    %s783 = sor.u32 256, 112
    %784 = vbcast.lane.b32.xlu0 %v726, %s783
    %v785 = vpop.permute.xlu0 %784
    %s787 = sor.u32 256, 120
    %788 = vbcast.lane.b32.xlu0 %v726, %s787
    %v789 = vpop.permute.xlu0 %788
    %v790 = vlaneseq
    %v791 = vshrl.u32 %v790, 7
    %v792 = vsub.s32 3, %v791
    %v793 = vrot.slane %v50, %v792
    %795 = vbcast.lane.b32.xlu0 %v793, 256
    %v796 = vpop.permute.xlu0 %795
    %s798 = sor.u32 256, 8
    %799 = vbcast.lane.b32.xlu0 %v793, %s798
    %v800 = vpop.permute.xlu0 %799
    %s802 = sor.u32 256, 16
    %803 = vbcast.lane.b32.xlu0 %v793, %s802
    %v804 = vpop.permute.xlu0 %803
    %s806 = sor.u32 256, 24
    %807 = vbcast.lane.b32.xlu0 %v793, %s806
    %v808 = vpop.permute.xlu0 %807
    %s810 = sor.u32 256, 32
    %811 = vbcast.lane.b32.xlu0 %v793, %s810
    %v812 = vpop.permute.xlu0 %811
    %s814 = sor.u32 256, 40
    %815 = vbcast.lane.b32.xlu0 %v793, %s814
    %v816 = vpop.permute.xlu0 %815
    %s818 = sor.u32 256, 48
    %819 = vbcast.lane.b32.xlu0 %v793, %s818
    %v820 = vpop.permute.xlu0 %819
    %s822 = sor.u32 256, 56
    %823 = vbcast.lane.b32.xlu0 %v793, %s822
    %v824 = vpop.permute.xlu0 %823
    %s826 = sor.u32 256, 64
    %827 = vbcast.lane.b32.xlu0 %v793, %s826
    %v828 = vpop.permute.xlu0 %827
    %s830 = sor.u32 256, 72
    %831 = vbcast.lane.b32.xlu0 %v793, %s830
    %v832 = vpop.permute.xlu0 %831
    %s834 = sor.u32 256, 80
    %835 = vbcast.lane.b32.xlu0 %v793, %s834
    %v836 = vpop.permute.xlu0 %835
    %s838 = sor.u32 256, 88
    %839 = vbcast.lane.b32.xlu0 %v793, %s838
    %v840 = vpop.permute.xlu0 %839
    %s842 = sor.u32 256, 96
    %843 = vbcast.lane.b32.xlu0 %v793, %s842
    %v844 = vpop.permute.xlu0 %843
    %s846 = sor.u32 256, 104
    %847 = vbcast.lane.b32.xlu0 %v793, %s846
    %v848 = vpop.permute.xlu0 %847
    %s850 = sor.u32 256, 112
    %851 = vbcast.lane.b32.xlu0 %v793, %s850
    %v852 = vpop.permute.xlu0 %851
    %s854 = sor.u32 256, 120
    %855 = vbcast.lane.b32.xlu0 %v793, %s854
    %v856 = vpop.permute.xlu0 %855
    %v857 = vlaneseq
    %v858 = vshrl.u32 %v857, 7
    %v859 = vsub.s32 4, %v858
    %v860 = vrot.slane %v50, %v859
    %862 = vbcast.lane.b32.xlu0 %v860, 256
    %v863 = vpop.permute.xlu0 %862
    %s865 = sor.u32 256, 8
    %866 = vbcast.lane.b32.xlu0 %v860, %s865
    %v867 = vpop.permute.xlu0 %866
    %s869 = sor.u32 256, 16
    %870 = vbcast.lane.b32.xlu0 %v860, %s869
    %v871 = vpop.permute.xlu0 %870
    %s873 = sor.u32 256, 24
    %874 = vbcast.lane.b32.xlu0 %v860, %s873
    %v875 = vpop.permute.xlu0 %874
    %s877 = sor.u32 256, 32
    %878 = vbcast.lane.b32.xlu0 %v860, %s877
    %v879 = vpop.permute.xlu0 %878
    %s881 = sor.u32 256, 40
    %882 = vbcast.lane.b32.xlu0 %v860, %s881
    %v883 = vpop.permute.xlu0 %882
    %s885 = sor.u32 256, 48
    %886 = vbcast.lane.b32.xlu0 %v860, %s885
    %v887 = vpop.permute.xlu0 %886
    %s889 = sor.u32 256, 56
    %890 = vbcast.lane.b32.xlu0 %v860, %s889
    %v891 = vpop.permute.xlu0 %890
    %s893 = sor.u32 256, 64
    %894 = vbcast.lane.b32.xlu0 %v860, %s893
    %v895 = vpop.permute.xlu0 %894
    %s897 = sor.u32 256, 72
    %898 = vbcast.lane.b32.xlu0 %v860, %s897
    %v899 = vpop.permute.xlu0 %898
    %s901 = sor.u32 256, 80
    %902 = vbcast.lane.b32.xlu0 %v860, %s901
    %v903 = vpop.permute.xlu0 %902
    %s905 = sor.u32 256, 88
    %906 = vbcast.lane.b32.xlu0 %v860, %s905
    %v907 = vpop.permute.xlu0 %906
    %s909 = sor.u32 256, 96
    %910 = vbcast.lane.b32.xlu0 %v860, %s909
    %v911 = vpop.permute.xlu0 %910
    %s913 = sor.u32 256, 104
    %914 = vbcast.lane.b32.xlu0 %v860, %s913
    %v915 = vpop.permute.xlu0 %914
    %s917 = sor.u32 256, 112
    %918 = vbcast.lane.b32.xlu0 %v860, %s917
    %v919 = vpop.permute.xlu0 %918
    %s921 = sor.u32 256, 120
    %922 = vbcast.lane.b32.xlu0 %v860, %s921
    %v923 = vpop.permute.xlu0 %922
    %v924 = vlaneseq
    %v925 = vshrl.u32 %v924, 7
    %v926 = vsub.s32 5, %v925
    %v927 = vrot.slane %v50, %v926
    %929 = vbcast.lane.b32.xlu0 %v927, 256
    %v930 = vpop.permute.xlu0 %929
    %s932 = sor.u32 256, 8
    %933 = vbcast.lane.b32.xlu0 %v927, %s932
    %v934 = vpop.permute.xlu0 %933
    %s936 = sor.u32 256, 16
    %937 = vbcast.lane.b32.xlu0 %v927, %s936
    %v938 = vpop.permute.xlu0 %937
    %s940 = sor.u32 256, 24
    %941 = vbcast.lane.b32.xlu0 %v927, %s940
    %v942 = vpop.permute.xlu0 %941
    %s944 = sor.u32 256, 32
    %945 = vbcast.lane.b32.xlu0 %v927, %s944
    %v946 = vpop.permute.xlu0 %945
    %s948 = sor.u32 256, 40
    %949 = vbcast.lane.b32.xlu0 %v927, %s948
    %v950 = vpop.permute.xlu0 %949
    %s952 = sor.u32 256, 48
    %953 = vbcast.lane.b32.xlu0 %v927, %s952
    %v954 = vpop.permute.xlu0 %953
    %s956 = sor.u32 256, 56
    %957 = vbcast.lane.b32.xlu0 %v927, %s956
    %v958 = vpop.permute.xlu0 %957
    %s960 = sor.u32 256, 64
    %961 = vbcast.lane.b32.xlu0 %v927, %s960
    %v962 = vpop.permute.xlu0 %961
    %s964 = sor.u32 256, 72
    %965 = vbcast.lane.b32.xlu0 %v927, %s964
    %v966 = vpop.permute.xlu0 %965
    %s968 = sor.u32 256, 80
    %969 = vbcast.lane.b32.xlu0 %v927, %s968
    %v970 = vpop.permute.xlu0 %969
    %s972 = sor.u32 256, 88
    %973 = vbcast.lane.b32.xlu0 %v927, %s972
    %v974 = vpop.permute.xlu0 %973
    %s976 = sor.u32 256, 96
    %977 = vbcast.lane.b32.xlu0 %v927, %s976
    %v978 = vpop.permute.xlu0 %977
    %s980 = sor.u32 256, 104
    %981 = vbcast.lane.b32.xlu0 %v927, %s980
    %v982 = vpop.permute.xlu0 %981
    %s984 = sor.u32 256, 112
    %985 = vbcast.lane.b32.xlu0 %v927, %s984
    %v986 = vpop.permute.xlu0 %985
    %s988 = sor.u32 256, 120
    %989 = vbcast.lane.b32.xlu0 %v927, %s988
    %v990 = vpop.permute.xlu0 %989
    %v991 = vlaneseq
    %v992 = vshrl.u32 %v991, 7
    %v993 = vsub.s32 6, %v992
    %v994 = vrot.slane %v50, %v993
    %996 = vbcast.lane.b32.xlu0 %v994, 256
    %v997 = vpop.permute.xlu0 %996
    %s999 = sor.u32 256, 8
    %1000 = vbcast.lane.b32.xlu0 %v994, %s999
    %v1001 = vpop.permute.xlu0 %1000
    %s1003 = sor.u32 256, 16
    %1004 = vbcast.lane.b32.xlu0 %v994, %s1003
    %v1005 = vpop.permute.xlu0 %1004
    %s1007 = sor.u32 256, 24
    %1008 = vbcast.lane.b32.xlu0 %v994, %s1007
    %v1009 = vpop.permute.xlu0 %1008
    %s1011 = sor.u32 256, 32
    %1012 = vbcast.lane.b32.xlu0 %v994, %s1011
    %v1013 = vpop.permute.xlu0 %1012
    %s1015 = sor.u32 256, 40
    %1016 = vbcast.lane.b32.xlu0 %v994, %s1015
    %v1017 = vpop.permute.xlu0 %1016
    %s1019 = sor.u32 256, 48
    %1020 = vbcast.lane.b32.xlu0 %v994, %s1019
    %v1021 = vpop.permute.xlu0 %1020
    %s1023 = sor.u32 256, 56
    %1024 = vbcast.lane.b32.xlu0 %v994, %s1023
    %v1025 = vpop.permute.xlu0 %1024
    %s1027 = sor.u32 256, 64
    %1028 = vbcast.lane.b32.xlu0 %v994, %s1027
    %v1029 = vpop.permute.xlu0 %1028
    %s1031 = sor.u32 256, 72
    %1032 = vbcast.lane.b32.xlu0 %v994, %s1031
    %v1033 = vpop.permute.xlu0 %1032
    %s1035 = sor.u32 256, 80
    %1036 = vbcast.lane.b32.xlu0 %v994, %s1035
    %v1037 = vpop.permute.xlu0 %1036
    %s1039 = sor.u32 256, 88
    %1040 = vbcast.lane.b32.xlu0 %v994, %s1039
    %v1041 = vpop.permute.xlu0 %1040
    %s1043 = sor.u32 256, 96
    %1044 = vbcast.lane.b32.xlu0 %v994, %s1043
    %v1045 = vpop.permute.xlu0 %1044
    %s1047 = sor.u32 256, 104
    %1048 = vbcast.lane.b32.xlu0 %v994, %s1047
    %v1049 = vpop.permute.xlu0 %1048
    %s1051 = sor.u32 256, 112
    %1052 = vbcast.lane.b32.xlu0 %v994, %s1051
    %v1053 = vpop.permute.xlu0 %1052
    %s1055 = sor.u32 256, 120
    %1056 = vbcast.lane.b32.xlu0 %v994, %s1055
    %v1057 = vpop.permute.xlu0 %1056
    %v1058 = vlaneseq
    %v1059 = vshrl.u32 %v1058, 7
    %v1060 = vsub.s32 7, %v1059
    %v1061 = vrot.slane %v50, %v1060
    %1063 = vbcast.lane.b32.xlu0 %v1061, 256
    %v1064 = vpop.permute.xlu0 %1063
    %s1066 = sor.u32 256, 8
    %1067 = vbcast.lane.b32.xlu0 %v1061, %s1066
    %v1068 = vpop.permute.xlu0 %1067
    %s1070 = sor.u32 256, 16
    %1071 = vbcast.lane.b32.xlu0 %v1061, %s1070
    %v1072 = vpop.permute.xlu0 %1071
    %s1074 = sor.u32 256, 24
    %1075 = vbcast.lane.b32.xlu0 %v1061, %s1074
    %v1076 = vpop.permute.xlu0 %1075
    %s1078 = sor.u32 256, 32
    %1079 = vbcast.lane.b32.xlu0 %v1061, %s1078
    %v1080 = vpop.permute.xlu0 %1079
    %s1082 = sor.u32 256, 40
    %1083 = vbcast.lane.b32.xlu0 %v1061, %s1082
    %v1084 = vpop.permute.xlu0 %1083
    %s1086 = sor.u32 256, 48
    %1087 = vbcast.lane.b32.xlu0 %v1061, %s1086
    %v1088 = vpop.permute.xlu0 %1087
    %s1090 = sor.u32 256, 56
    %1091 = vbcast.lane.b32.xlu0 %v1061, %s1090
    %v1092 = vpop.permute.xlu0 %1091
    %s1094 = sor.u32 256, 64
    %1095 = vbcast.lane.b32.xlu0 %v1061, %s1094
    %v1096 = vpop.permute.xlu0 %1095
    %s1098 = sor.u32 256, 72
    %1099 = vbcast.lane.b32.xlu0 %v1061, %s1098
    %v1100 = vpop.permute.xlu0 %1099
    %s1102 = sor.u32 256, 80
    %1103 = vbcast.lane.b32.xlu0 %v1061, %s1102
    %v1104 = vpop.permute.xlu0 %1103
    %s1106 = sor.u32 256, 88
    %1107 = vbcast.lane.b32.xlu0 %v1061, %s1106
    %v1108 = vpop.permute.xlu0 %1107
    %s1110 = sor.u32 256, 96
    %1111 = vbcast.lane.b32.xlu0 %v1061, %s1110
    %v1112 = vpop.permute.xlu0 %1111
    %s1114 = sor.u32 256, 104
    %1115 = vbcast.lane.b32.xlu0 %v1061, %s1114
    %v1116 = vpop.permute.xlu0 %1115
    %s1118 = sor.u32 256, 112
    %1119 = vbcast.lane.b32.xlu0 %v1061, %s1118
    %v1120 = vpop.permute.xlu0 %1119
    %s1122 = sor.u32 256, 120
    %1123 = vbcast.lane.b32.xlu0 %v1061, %s1122
    %v1124 = vpop.permute.xlu0 %1123
    %v1127 = vcombine.high %v51, %v51
    %v1129 = vunpack.c.l.s4 1966171168
    %v1130 = vunpack.c.0.s8 %v1129
    %v1131 = vlaneseq
    %v1132 = vshrl.u32 %v1131, 7
    %v1133 = vsub.s32 %v1130, %v1132
    %v1134 = vrot.slane %v51, %v1133
    %v1136 = vunpack.c.l.s4 1966171168
    %v1137 = vunpack.c.0.s8 %v1136
    %v1138 = vlaneseq
    %v1139 = vshrl.u32 %v1138, 7
    %v1140 = vsub.s32 %v1137, %v1139
    %v1141 = vrot.slane %v1127, %v1140
    %v1142 = vcombine.high %v1134, %v1134
    %v1143 = vcombine.high %v1141, %v1141
    %v1145 = vunpack.c.l.s4 1966171168
    %v1146 = vunpack.c.0.s8 %v1145
    %v1147 = vlaneseq
    %v1148 = vshrl.u32 %v1147, 7
    %v1149 = vsub.s32 %v1146, %v1148
    %v1150 = vrot.slane %v1134, %v1149
    %v1152 = vunpack.c.l.s4 1966171168
    %v1153 = vunpack.c.0.s8 %v1152
    %v1154 = vlaneseq
    %v1155 = vshrl.u32 %v1154, 7
    %v1156 = vsub.s32 %v1153, %v1155
    %v1157 = vrot.slane %v1141, %v1156
    %v1159 = vunpack.c.l.s4 1966171168
    %v1160 = vunpack.c.0.s8 %v1159
    %v1161 = vlaneseq
    %v1162 = vshrl.u32 %v1161, 7
    %v1163 = vsub.s32 %v1160, %v1162
    %v1164 = vrot.slane %v1142, %v1163
    %v1166 = vunpack.c.l.s4 1966171168
    %v1167 = vunpack.c.0.s8 %v1166
    %v1168 = vlaneseq
    %v1169 = vshrl.u32 %v1168, 7
    %v1170 = vsub.s32 %v1167, %v1169
    %v1171 = vrot.slane %v1143, %v1170
    %v1172 = vcombine.high %v1150, %v1150
    %v1173 = vcombine.high %v1157, %v1157
    %v1174 = vcombine.high %v1164, %v1164
    %v1175 = vcombine.high %v1171, %v1171
    %v1176 = vcombine.high %v52, %v52
    %v1178 = vunpack.c.l.s4 1966171168
    %v1179 = vunpack.c.0.s8 %v1178
    %v1180 = vlaneseq
    %v1181 = vshrl.u32 %v1180, 7
    %v1182 = vsub.s32 %v1179, %v1181
    %v1183 = vrot.slane %v52, %v1182
    %v1185 = vunpack.c.l.s4 1966171168
    %v1186 = vunpack.c.0.s8 %v1185
    %v1187 = vlaneseq
    %v1188 = vshrl.u32 %v1187, 7
    %v1189 = vsub.s32 %v1186, %v1188
    %v1190 = vrot.slane %v1176, %v1189
    %v1191 = vcombine.high %v1183, %v1183
    %v1192 = vcombine.high %v1190, %v1190
    %v1194 = vunpack.c.l.s4 1966171168
    %v1195 = vunpack.c.0.s8 %v1194
    %v1196 = vlaneseq
    %v1197 = vshrl.u32 %v1196, 7
    %v1198 = vsub.s32 %v1195, %v1197
    %v1199 = vrot.slane %v1183, %v1198
    %v1201 = vunpack.c.l.s4 1966171168
    %v1202 = vunpack.c.0.s8 %v1201
    %v1203 = vlaneseq
    %v1204 = vshrl.u32 %v1203, 7
    %v1205 = vsub.s32 %v1202, %v1204
    %v1206 = vrot.slane %v1190, %v1205
    %v1208 = vunpack.c.l.s4 1966171168
    %v1209 = vunpack.c.0.s8 %v1208
    %v1210 = vlaneseq
    %v1211 = vshrl.u32 %v1210, 7
    %v1212 = vsub.s32 %v1209, %v1211
    %v1213 = vrot.slane %v1191, %v1212
    %v1215 = vunpack.c.l.s4 1966171168
    %v1216 = vunpack.c.0.s8 %v1215
    %v1217 = vlaneseq
    %v1218 = vshrl.u32 %v1217, 7
    %v1219 = vsub.s32 %v1216, %v1218
    %v1220 = vrot.slane %v1192, %v1219
    %v1221 = vcombine.high %v1199, %v1199
    %v1222 = vcombine.high %v1206, %v1206
    %v1223 = vcombine.high %v1213, %v1213
    %v1224 = vcombine.high %v1220, %v1220
    %v1225 = vlaneseq
    %v1226 = vshrl.u32 %v1225, 7
    %v1227 = vsub.s32 0, %v1226
    %v1228 = vrot.slane %v1150, %v1227
    %v1229 = vlaneseq
    %v1230 = vshrl.u32 %v1229, 7
    %v1231 = vsub.s32 0, %v1230
    %v1232 = vrot.slane %v1164, %v1231
    %v1233 = vlaneseq
    %v1234 = vshrl.u32 %v1233, 7
    %v1235 = vsub.s32 0, %v1234
    %v1236 = vrot.slane %v1172, %v1235
    %v1237 = vlaneseq
    %v1238 = vshrl.u32 %v1237, 7
    %v1239 = vsub.s32 0, %v1238
    %v1240 = vrot.slane %v1174, %v1239
    %v1241 = vlaneseq
    %v1242 = vshrl.u32 %v1241, 7
    %v1243 = vsub.s32 0, %v1242
    %v1244 = vrot.slane %v1157, %v1243
    %v1245 = vlaneseq
    %v1246 = vshrl.u32 %v1245, 7
    %v1247 = vsub.s32 0, %v1246
    %v1248 = vrot.slane %v1171, %v1247
    %v1249 = vlaneseq
    %v1250 = vshrl.u32 %v1249, 7
    %v1251 = vsub.s32 0, %v1250
    %v1252 = vrot.slane %v1173, %v1251
    %v1253 = vlaneseq
    %v1254 = vshrl.u32 %v1253, 7
    %v1255 = vsub.s32 0, %v1254
    %v1256 = vrot.slane %v1175, %v1255
    %v1257 = vlaneseq
    %v1258 = vshrl.u32 %v1257, 7
    %v1259 = vsub.s32 0, %v1258
    %v1260 = vrot.slane %v1199, %v1259
    %v1261 = vlaneseq
    %v1262 = vshrl.u32 %v1261, 7
    %v1263 = vsub.s32 0, %v1262
    %v1264 = vrot.slane %v1213, %v1263
    %v1265 = vlaneseq
    %v1266 = vshrl.u32 %v1265, 7
    %v1267 = vsub.s32 0, %v1266
    %v1268 = vrot.slane %v1221, %v1267
    %v1269 = vlaneseq
    %v1270 = vshrl.u32 %v1269, 7
    %v1271 = vsub.s32 0, %v1270
    %v1272 = vrot.slane %v1223, %v1271
    %v1273 = vlaneseq
    %v1274 = vshrl.u32 %v1273, 7
    %v1275 = vsub.s32 0, %v1274
    %v1276 = vrot.slane %v1206, %v1275
    %v1277 = vlaneseq
    %v1278 = vshrl.u32 %v1277, 7
    %v1279 = vsub.s32 0, %v1278
    %v1280 = vrot.slane %v1220, %v1279
    %v1281 = vlaneseq
    %v1282 = vshrl.u32 %v1281, 7
    %v1283 = vsub.s32 0, %v1282
    %v1284 = vrot.slane %v1222, %v1283
    %v1285 = vlaneseq
    %v1286 = vshrl.u32 %v1285, 7
    %v1287 = vsub.s32 0, %v1286
    %v1288 = vrot.slane %v1224, %v1287
    %v1305 = vsub.f32 %v59, %v1228
    %v1306 = vsub.f32 %v63, %v1228
    %v1307 = vsub.f32 %v67, %v1228
    %v1308 = vsub.f32 %v71, %v1228
    %v1309 = vsub.f32 %v75, %v1228
    %v1310 = vsub.f32 %v79, %v1228
    %v1311 = vsub.f32 %v83, %v1228
    %v1312 = vsub.f32 %v87, %v1228
    %v1313 = vsub.f32 %v91, %v1228
    %v1314 = vsub.f32 %v95, %v1228
    %v1315 = vsub.f32 %v99, %v1228
    %v1316 = vsub.f32 %v103, %v1228
    %v1317 = vsub.f32 %v107, %v1228
    %v1318 = vsub.f32 %v111, %v1228
    %v1319 = vsub.f32 %v115, %v1228
    %v1320 = vsub.f32 %v119, %v1228
    %v1321 = vsub.f32 %v126, %v1232
    %v1322 = vsub.f32 %v130, %v1232
    %v1323 = vsub.f32 %v134, %v1232
    %v1324 = vsub.f32 %v138, %v1232
    %v1325 = vsub.f32 %v142, %v1232
    %v1326 = vsub.f32 %v146, %v1232
    %v1327 = vsub.f32 %v150, %v1232
    %v1328 = vsub.f32 %v154, %v1232
    %v1329 = vsub.f32 %v158, %v1232
    %v1330 = vsub.f32 %v162, %v1232
    %v1331 = vsub.f32 %v166, %v1232
    %v1332 = vsub.f32 %v170, %v1232
    %v1333 = vsub.f32 %v174, %v1232
    %v1334 = vsub.f32 %v178, %v1232
    %v1335 = vsub.f32 %v182, %v1232
    %v1336 = vsub.f32 %v186, %v1232
    %v1337 = vsub.f32 %v193, %v1236
    %v1338 = vsub.f32 %v197, %v1236
    %v1339 = vsub.f32 %v201, %v1236
    %v1340 = vsub.f32 %v205, %v1236
    %v1341 = vsub.f32 %v209, %v1236
    %v1342 = vsub.f32 %v213, %v1236
    %v1343 = vsub.f32 %v217, %v1236
    %v1344 = vsub.f32 %v221, %v1236
    %v1345 = vsub.f32 %v225, %v1236
    %v1346 = vsub.f32 %v229, %v1236
    %v1347 = vsub.f32 %v233, %v1236
    %v1348 = vsub.f32 %v237, %v1236
    %v1349 = vsub.f32 %v241, %v1236
    %v1350 = vsub.f32 %v245, %v1236
    %v1351 = vsub.f32 %v249, %v1236
    %v1352 = vsub.f32 %v253, %v1236
    %v1353 = vsub.f32 %v260, %v1240
    %v1354 = vsub.f32 %v264, %v1240
    %v1355 = vsub.f32 %v268, %v1240
    %v1356 = vsub.f32 %v272, %v1240
    %v1357 = vsub.f32 %v276, %v1240
    %v1358 = vsub.f32 %v280, %v1240
    %v1359 = vsub.f32 %v284, %v1240
    %v1360 = vsub.f32 %v288, %v1240
    %v1361 = vsub.f32 %v292, %v1240
    %v1362 = vsub.f32 %v296, %v1240
    %v1363 = vsub.f32 %v300, %v1240
    %v1364 = vsub.f32 %v304, %v1240
    %v1365 = vsub.f32 %v308, %v1240
    %v1366 = vsub.f32 %v312, %v1240
    %v1367 = vsub.f32 %v316, %v1240
    %v1368 = vsub.f32 %v320, %v1240
    %v1369 = vsub.f32 %v327, %v1244
    %v1370 = vsub.f32 %v331, %v1244
    %v1371 = vsub.f32 %v335, %v1244
    %v1372 = vsub.f32 %v339, %v1244
    %v1373 = vsub.f32 %v343, %v1244
    %v1374 = vsub.f32 %v347, %v1244
    %v1375 = vsub.f32 %v351, %v1244
    %v1376 = vsub.f32 %v355, %v1244
    %v1377 = vsub.f32 %v359, %v1244
    %v1378 = vsub.f32 %v363, %v1244
    %v1379 = vsub.f32 %v367, %v1244
    %v1380 = vsub.f32 %v371, %v1244
    %v1381 = vsub.f32 %v375, %v1244
    %v1382 = vsub.f32 %v379, %v1244
    %v1383 = vsub.f32 %v383, %v1244
    %v1384 = vsub.f32 %v387, %v1244
    %v1385 = vsub.f32 %v394, %v1248
    %v1386 = vsub.f32 %v398, %v1248
    %v1387 = vsub.f32 %v402, %v1248
    %v1388 = vsub.f32 %v406, %v1248
    %v1389 = vsub.f32 %v410, %v1248
    %v1390 = vsub.f32 %v414, %v1248
    %v1391 = vsub.f32 %v418, %v1248
    %v1392 = vsub.f32 %v422, %v1248
    %v1393 = vsub.f32 %v426, %v1248
    %v1394 = vsub.f32 %v430, %v1248
    %v1395 = vsub.f32 %v434, %v1248
    %v1396 = vsub.f32 %v438, %v1248
    %v1397 = vsub.f32 %v442, %v1248
    %v1398 = vsub.f32 %v446, %v1248
    %v1399 = vsub.f32 %v450, %v1248
    %v1400 = vsub.f32 %v454, %v1248
    %v1401 = vsub.f32 %v461, %v1252
    %v1402 = vsub.f32 %v465, %v1252
    %v1403 = vsub.f32 %v469, %v1252
    %v1404 = vsub.f32 %v473, %v1252
    %v1405 = vsub.f32 %v477, %v1252
    %v1406 = vsub.f32 %v481, %v1252
    %v1407 = vsub.f32 %v485, %v1252
    %v1408 = vsub.f32 %v489, %v1252
    %v1409 = vsub.f32 %v493, %v1252
    %v1410 = vsub.f32 %v497, %v1252
    %v1411 = vsub.f32 %v501, %v1252
    %v1412 = vsub.f32 %v505, %v1252
    %v1413 = vsub.f32 %v509, %v1252
    %v1414 = vsub.f32 %v513, %v1252
    %v1415 = vsub.f32 %v517, %v1252
    %v1416 = vsub.f32 %v521, %v1252
    %v1417 = vsub.f32 %v528, %v1256
    %v1418 = vsub.f32 %v532, %v1256
    %v1419 = vsub.f32 %v536, %v1256
    %v1420 = vsub.f32 %v540, %v1256
    %v1421 = vsub.f32 %v544, %v1256
    %v1422 = vsub.f32 %v548, %v1256
    %v1423 = vsub.f32 %v552, %v1256
    %v1424 = vsub.f32 %v556, %v1256
    %v1425 = vsub.f32 %v560, %v1256
    %v1426 = vsub.f32 %v564, %v1256
    %v1427 = vsub.f32 %v568, %v1256
    %v1428 = vsub.f32 %v572, %v1256
    %v1429 = vsub.f32 %v576, %v1256
    %v1430 = vsub.f32 %v580, %v1256
    %v1431 = vsub.f32 %v584, %v1256
    %v1432 = vsub.f32 %v588, %v1256
    %v1433 = vsub.f32 %v595, %v1260
    %v1434 = vsub.f32 %v599, %v1260
    %v1435 = vsub.f32 %v603, %v1260
    %v1436 = vsub.f32 %v607, %v1260
    %v1437 = vsub.f32 %v611, %v1260
    %v1438 = vsub.f32 %v615, %v1260
    %v1439 = vsub.f32 %v619, %v1260
    %v1440 = vsub.f32 %v623, %v1260
    %v1441 = vsub.f32 %v627, %v1260
    %v1442 = vsub.f32 %v631, %v1260
    %v1443 = vsub.f32 %v635, %v1260
    %v1444 = vsub.f32 %v639, %v1260
    %v1445 = vsub.f32 %v643, %v1260
    %v1446 = vsub.f32 %v647, %v1260
    %v1447 = vsub.f32 %v651, %v1260
    %v1448 = vsub.f32 %v655, %v1260
    %v1449 = vsub.f32 %v662, %v1264
    %v1450 = vsub.f32 %v666, %v1264
    %v1451 = vsub.f32 %v670, %v1264
    %v1452 = vsub.f32 %v674, %v1264
    %v1453 = vsub.f32 %v678, %v1264
    %v1454 = vsub.f32 %v682, %v1264
    %v1455 = vsub.f32 %v686, %v1264
    %v1456 = vsub.f32 %v690, %v1264
    %v1457 = vsub.f32 %v694, %v1264
    %v1458 = vsub.f32 %v698, %v1264
    %v1459 = vsub.f32 %v702, %v1264
    %v1460 = vsub.f32 %v706, %v1264
    %v1461 = vsub.f32 %v710, %v1264
    %v1462 = vsub.f32 %v714, %v1264
    %v1463 = vsub.f32 %v718, %v1264
    %v1464 = vsub.f32 %v722, %v1264
    %v1465 = vsub.f32 %v729, %v1268
    %v1466 = vsub.f32 %v733, %v1268
    %v1467 = vsub.f32 %v737, %v1268
    %v1468 = vsub.f32 %v741, %v1268
    %v1469 = vsub.f32 %v745, %v1268
    %v1470 = vsub.f32 %v749, %v1268
    %v1471 = vsub.f32 %v753, %v1268
    %v1472 = vsub.f32 %v757, %v1268
    %v1473 = vsub.f32 %v761, %v1268
    %v1474 = vsub.f32 %v765, %v1268
    %v1475 = vsub.f32 %v769, %v1268
    %v1476 = vsub.f32 %v773, %v1268
    %v1477 = vsub.f32 %v777, %v1268
    %v1478 = vsub.f32 %v781, %v1268
    %v1479 = vsub.f32 %v785, %v1268
    %v1480 = vsub.f32 %v789, %v1268
    %v1481 = vsub.f32 %v796, %v1272
    %v1482 = vsub.f32 %v800, %v1272
    %v1483 = vsub.f32 %v804, %v1272
    %v1484 = vsub.f32 %v808, %v1272
    %v1485 = vsub.f32 %v812, %v1272
    %v1486 = vsub.f32 %v816, %v1272
    %v1487 = vsub.f32 %v820, %v1272
    %v1488 = vsub.f32 %v824, %v1272
    %v1489 = vsub.f32 %v828, %v1272
    %v1490 = vsub.f32 %v832, %v1272
    %v1491 = vsub.f32 %v836, %v1272
    %v1492 = vsub.f32 %v840, %v1272
    %v1493 = vsub.f32 %v844, %v1272
    %v1494 = vsub.f32 %v848, %v1272
    %v1495 = vsub.f32 %v852, %v1272
    %v1496 = vsub.f32 %v856, %v1272
    %v1497 = vsub.f32 %v863, %v1276
    %v1498 = vsub.f32 %v867, %v1276
    %v1499 = vsub.f32 %v871, %v1276
    %v1500 = vsub.f32 %v875, %v1276
    %v1501 = vsub.f32 %v879, %v1276
    %v1502 = vsub.f32 %v883, %v1276
    %v1503 = vsub.f32 %v887, %v1276
    %v1504 = vsub.f32 %v891, %v1276
    %v1505 = vsub.f32 %v895, %v1276
    %v1506 = vsub.f32 %v899, %v1276
    %v1507 = vsub.f32 %v903, %v1276
    %v1508 = vsub.f32 %v907, %v1276
    %v1509 = vsub.f32 %v911, %v1276
    %v1510 = vsub.f32 %v915, %v1276
    %v1511 = vsub.f32 %v919, %v1276
    %v1512 = vsub.f32 %v923, %v1276
    %v1513 = vsub.f32 %v930, %v1280
    %v1514 = vsub.f32 %v934, %v1280
    %v1515 = vsub.f32 %v938, %v1280
    %v1516 = vsub.f32 %v942, %v1280
    %v1517 = vsub.f32 %v946, %v1280
    %v1518 = vsub.f32 %v950, %v1280
    %v1519 = vsub.f32 %v954, %v1280
    %v1520 = vsub.f32 %v958, %v1280
    %v1521 = vsub.f32 %v962, %v1280
    %v1522 = vsub.f32 %v966, %v1280
    %v1523 = vsub.f32 %v970, %v1280
    %v1524 = vsub.f32 %v974, %v1280
    %v1525 = vsub.f32 %v978, %v1280
    %v1526 = vsub.f32 %v982, %v1280
    %v1527 = vsub.f32 %v986, %v1280
    %v1528 = vsub.f32 %v990, %v1280
    %v1529 = vsub.f32 %v997, %v1284
    %v1530 = vsub.f32 %v1001, %v1284
    %v1531 = vsub.f32 %v1005, %v1284
    %v1532 = vsub.f32 %v1009, %v1284
    %v1533 = vsub.f32 %v1013, %v1284
    %v1534 = vsub.f32 %v1017, %v1284
    %v1535 = vsub.f32 %v1021, %v1284
    %v1536 = vsub.f32 %v1025, %v1284
    %v1537 = vsub.f32 %v1029, %v1284
    %v1538 = vsub.f32 %v1033, %v1284
    %v1539 = vsub.f32 %v1037, %v1284
    %v1540 = vsub.f32 %v1041, %v1284
    %v1541 = vsub.f32 %v1045, %v1284
    %v1542 = vsub.f32 %v1049, %v1284
    %v1543 = vsub.f32 %v1053, %v1284
    %v1544 = vsub.f32 %v1057, %v1284
    %v1545 = vsub.f32 %v1064, %v1288
    %v1546 = vsub.f32 %v1068, %v1288
    %v1547 = vsub.f32 %v1072, %v1288
    %v1548 = vsub.f32 %v1076, %v1288
    %v1549 = vsub.f32 %v1080, %v1288
    %v1550 = vsub.f32 %v1084, %v1288
    %v1551 = vsub.f32 %v1088, %v1288
    %v1552 = vsub.f32 %v1092, %v1288
    %v1553 = vsub.f32 %v1096, %v1288
    %v1554 = vsub.f32 %v1100, %v1288
    %v1555 = vsub.f32 %v1104, %v1288
    %v1556 = vsub.f32 %v1108, %v1288
    %v1557 = vsub.f32 %v1112, %v1288
    %v1558 = vsub.f32 %v1116, %v1288
    %v1559 = vsub.f32 %v1120, %v1288
    %v1560 = vsub.f32 %v1124, %v1288
    %v1561 = vmax.f32 %v1305, 0.0
    %v1562 = vmax.f32 %v1306, 0.0
    %v1563 = vmax.f32 %v1307, 0.0
    %v1564 = vmax.f32 %v1308, 0.0
    %v1565 = vmax.f32 %v1309, 0.0
    %v1566 = vmax.f32 %v1310, 0.0
    %v1567 = vmax.f32 %v1311, 0.0
    %v1568 = vmax.f32 %v1312, 0.0
    %v1569 = vmax.f32 %v1313, 0.0
    %v1570 = vmax.f32 %v1314, 0.0
    %v1571 = vmax.f32 %v1315, 0.0
    %v1572 = vmax.f32 %v1316, 0.0
    %v1573 = vmax.f32 %v1317, 0.0
    %v1574 = vmax.f32 %v1318, 0.0
    %v1575 = vmax.f32 %v1319, 0.0
    %v1576 = vmax.f32 %v1320, 0.0
    %v1577 = vmax.f32 %v1321, 0.0
    %v1578 = vmax.f32 %v1322, 0.0
    %v1579 = vmax.f32 %v1323, 0.0
    %v1580 = vmax.f32 %v1324, 0.0
    %v1581 = vmax.f32 %v1325, 0.0
    %v1582 = vmax.f32 %v1326, 0.0
    %v1583 = vmax.f32 %v1327, 0.0
    %v1584 = vmax.f32 %v1328, 0.0
    %v1585 = vmax.f32 %v1329, 0.0
    %v1586 = vmax.f32 %v1330, 0.0
    %v1587 = vmax.f32 %v1331, 0.0
    %v1588 = vmax.f32 %v1332, 0.0
    %v1589 = vmax.f32 %v1333, 0.0
    %v1590 = vmax.f32 %v1334, 0.0
    %v1591 = vmax.f32 %v1335, 0.0
    %v1592 = vmax.f32 %v1336, 0.0
    %v1593 = vmax.f32 %v1337, 0.0
    %v1594 = vmax.f32 %v1338, 0.0
    %v1595 = vmax.f32 %v1339, 0.0
    %v1596 = vmax.f32 %v1340, 0.0
    %v1597 = vmax.f32 %v1341, 0.0
    %v1598 = vmax.f32 %v1342, 0.0
    %v1599 = vmax.f32 %v1343, 0.0
    %v1600 = vmax.f32 %v1344, 0.0
    %v1601 = vmax.f32 %v1345, 0.0
    %v1602 = vmax.f32 %v1346, 0.0
    %v1603 = vmax.f32 %v1347, 0.0
    %v1604 = vmax.f32 %v1348, 0.0
    %v1605 = vmax.f32 %v1349, 0.0
    %v1606 = vmax.f32 %v1350, 0.0
    %v1607 = vmax.f32 %v1351, 0.0
    %v1608 = vmax.f32 %v1352, 0.0
    %v1609 = vmax.f32 %v1353, 0.0
    %v1610 = vmax.f32 %v1354, 0.0
    %v1611 = vmax.f32 %v1355, 0.0
    %v1612 = vmax.f32 %v1356, 0.0
    %v1613 = vmax.f32 %v1357, 0.0
    %v1614 = vmax.f32 %v1358, 0.0
    %v1615 = vmax.f32 %v1359, 0.0
    %v1616 = vmax.f32 %v1360, 0.0
    %v1617 = vmax.f32 %v1361, 0.0
    %v1618 = vmax.f32 %v1362, 0.0
    %v1619 = vmax.f32 %v1363, 0.0
    %v1620 = vmax.f32 %v1364, 0.0
    %v1621 = vmax.f32 %v1365, 0.0
    %v1622 = vmax.f32 %v1366, 0.0
    %v1623 = vmax.f32 %v1367, 0.0
    %v1624 = vmax.f32 %v1368, 0.0
    %v1625 = vmax.f32 %v1369, 0.0
    %v1626 = vmax.f32 %v1370, 0.0
    %v1627 = vmax.f32 %v1371, 0.0
    %v1628 = vmax.f32 %v1372, 0.0
    %v1629 = vmax.f32 %v1373, 0.0
    %v1630 = vmax.f32 %v1374, 0.0
    %v1631 = vmax.f32 %v1375, 0.0
    %v1632 = vmax.f32 %v1376, 0.0
    %v1633 = vmax.f32 %v1377, 0.0
    %v1634 = vmax.f32 %v1378, 0.0
    %v1635 = vmax.f32 %v1379, 0.0
    %v1636 = vmax.f32 %v1380, 0.0
    %v1637 = vmax.f32 %v1381, 0.0
    %v1638 = vmax.f32 %v1382, 0.0
    %v1639 = vmax.f32 %v1383, 0.0
    %v1640 = vmax.f32 %v1384, 0.0
    %v1641 = vmax.f32 %v1385, 0.0
    %v1642 = vmax.f32 %v1386, 0.0
    %v1643 = vmax.f32 %v1387, 0.0
    %v1644 = vmax.f32 %v1388, 0.0
    %v1645 = vmax.f32 %v1389, 0.0
    %v1646 = vmax.f32 %v1390, 0.0
    %v1647 = vmax.f32 %v1391, 0.0
    %v1648 = vmax.f32 %v1392, 0.0
    %v1649 = vmax.f32 %v1393, 0.0
    %v1650 = vmax.f32 %v1394, 0.0
    %v1651 = vmax.f32 %v1395, 0.0
    %v1652 = vmax.f32 %v1396, 0.0
    %v1653 = vmax.f32 %v1397, 0.0
    %v1654 = vmax.f32 %v1398, 0.0
    %v1655 = vmax.f32 %v1399, 0.0
    %v1656 = vmax.f32 %v1400, 0.0
    %v1657 = vmax.f32 %v1401, 0.0
    %v1658 = vmax.f32 %v1402, 0.0
    %v1659 = vmax.f32 %v1403, 0.0
    %v1660 = vmax.f32 %v1404, 0.0
    %v1661 = vmax.f32 %v1405, 0.0
    %v1662 = vmax.f32 %v1406, 0.0
    %v1663 = vmax.f32 %v1407, 0.0
    %v1664 = vmax.f32 %v1408, 0.0
    %v1665 = vmax.f32 %v1409, 0.0
    %v1666 = vmax.f32 %v1410, 0.0
    %v1667 = vmax.f32 %v1411, 0.0
    %v1668 = vmax.f32 %v1412, 0.0
    %v1669 = vmax.f32 %v1413, 0.0
    %v1670 = vmax.f32 %v1414, 0.0
    %v1671 = vmax.f32 %v1415, 0.0
    %v1672 = vmax.f32 %v1416, 0.0
    %v1673 = vmax.f32 %v1417, 0.0
    %v1674 = vmax.f32 %v1418, 0.0
    %v1675 = vmax.f32 %v1419, 0.0
    %v1676 = vmax.f32 %v1420, 0.0
    %v1677 = vmax.f32 %v1421, 0.0
    %v1678 = vmax.f32 %v1422, 0.0
    %v1679 = vmax.f32 %v1423, 0.0
    %v1680 = vmax.f32 %v1424, 0.0
    %v1681 = vmax.f32 %v1425, 0.0
    %v1682 = vmax.f32 %v1426, 0.0
    %v1683 = vmax.f32 %v1427, 0.0
    %v1684 = vmax.f32 %v1428, 0.0
    %v1685 = vmax.f32 %v1429, 0.0
    %v1686 = vmax.f32 %v1430, 0.0
    %v1687 = vmax.f32 %v1431, 0.0
    %v1688 = vmax.f32 %v1432, 0.0
    %v1689 = vmax.f32 %v1433, 0.0
    %v1690 = vmax.f32 %v1434, 0.0
    %v1691 = vmax.f32 %v1435, 0.0
    %v1692 = vmax.f32 %v1436, 0.0
    %v1693 = vmax.f32 %v1437, 0.0
    %v1694 = vmax.f32 %v1438, 0.0
    %v1695 = vmax.f32 %v1439, 0.0
    %v1696 = vmax.f32 %v1440, 0.0
    %v1697 = vmax.f32 %v1441, 0.0
    %v1698 = vmax.f32 %v1442, 0.0
    %v1699 = vmax.f32 %v1443, 0.0
    %v1700 = vmax.f32 %v1444, 0.0
    %v1701 = vmax.f32 %v1445, 0.0
    %v1702 = vmax.f32 %v1446, 0.0
    %v1703 = vmax.f32 %v1447, 0.0
    %v1704 = vmax.f32 %v1448, 0.0
    %v1705 = vmax.f32 %v1449, 0.0
    %v1706 = vmax.f32 %v1450, 0.0
    %v1707 = vmax.f32 %v1451, 0.0
    %v1708 = vmax.f32 %v1452, 0.0
    %v1709 = vmax.f32 %v1453, 0.0
    %v1710 = vmax.f32 %v1454, 0.0
    %v1711 = vmax.f32 %v1455, 0.0
    %v1712 = vmax.f32 %v1456, 0.0
    %v1713 = vmax.f32 %v1457, 0.0
    %v1714 = vmax.f32 %v1458, 0.0
    %v1715 = vmax.f32 %v1459, 0.0
    %v1716 = vmax.f32 %v1460, 0.0
    %v1717 = vmax.f32 %v1461, 0.0
    %v1718 = vmax.f32 %v1462, 0.0
    %v1719 = vmax.f32 %v1463, 0.0
    %v1720 = vmax.f32 %v1464, 0.0
    %v1721 = vmax.f32 %v1465, 0.0
    %v1722 = vmax.f32 %v1466, 0.0
    %v1723 = vmax.f32 %v1467, 0.0
    %v1724 = vmax.f32 %v1468, 0.0
    %v1725 = vmax.f32 %v1469, 0.0
    %v1726 = vmax.f32 %v1470, 0.0
    %v1727 = vmax.f32 %v1471, 0.0
    %v1728 = vmax.f32 %v1472, 0.0
    %v1729 = vmax.f32 %v1473, 0.0
    %v1730 = vmax.f32 %v1474, 0.0
    %v1731 = vmax.f32 %v1475, 0.0
    %v1732 = vmax.f32 %v1476, 0.0
    %v1733 = vmax.f32 %v1477, 0.0
    %v1734 = vmax.f32 %v1478, 0.0
    %v1735 = vmax.f32 %v1479, 0.0
    %v1736 = vmax.f32 %v1480, 0.0
    %v1737 = vmax.f32 %v1481, 0.0
    %v1738 = vmax.f32 %v1482, 0.0
    %v1739 = vmax.f32 %v1483, 0.0
    %v1740 = vmax.f32 %v1484, 0.0
    %v1741 = vmax.f32 %v1485, 0.0
    %v1742 = vmax.f32 %v1486, 0.0
    %v1743 = vmax.f32 %v1487, 0.0
    %v1744 = vmax.f32 %v1488, 0.0
    %v1745 = vmax.f32 %v1489, 0.0
    %v1746 = vmax.f32 %v1490, 0.0
    %v1747 = vmax.f32 %v1491, 0.0
    %v1748 = vmax.f32 %v1492, 0.0
    %v1749 = vmax.f32 %v1493, 0.0
    %v1750 = vmax.f32 %v1494, 0.0
    %v1751 = vmax.f32 %v1495, 0.0
    %v1752 = vmax.f32 %v1496, 0.0
    %v1753 = vmax.f32 %v1497, 0.0
    %v1754 = vmax.f32 %v1498, 0.0
    %v1755 = vmax.f32 %v1499, 0.0
    %v1756 = vmax.f32 %v1500, 0.0
    %v1757 = vmax.f32 %v1501, 0.0
    %v1758 = vmax.f32 %v1502, 0.0
    %v1759 = vmax.f32 %v1503, 0.0
    %v1760 = vmax.f32 %v1504, 0.0
    %v1761 = vmax.f32 %v1505, 0.0
    %v1762 = vmax.f32 %v1506, 0.0
    %v1763 = vmax.f32 %v1507, 0.0
    %v1764 = vmax.f32 %v1508, 0.0
    %v1765 = vmax.f32 %v1509, 0.0
    %v1766 = vmax.f32 %v1510, 0.0
    %v1767 = vmax.f32 %v1511, 0.0
    %v1768 = vmax.f32 %v1512, 0.0
    %v1769 = vmax.f32 %v1513, 0.0
    %v1770 = vmax.f32 %v1514, 0.0
    %v1771 = vmax.f32 %v1515, 0.0
    %v1772 = vmax.f32 %v1516, 0.0
    %v1773 = vmax.f32 %v1517, 0.0
    %v1774 = vmax.f32 %v1518, 0.0
    %v1775 = vmax.f32 %v1519, 0.0
    %v1776 = vmax.f32 %v1520, 0.0
    %v1777 = vmax.f32 %v1521, 0.0
    %v1778 = vmax.f32 %v1522, 0.0
    %v1779 = vmax.f32 %v1523, 0.0
    %v1780 = vmax.f32 %v1524, 0.0
    %v1781 = vmax.f32 %v1525, 0.0
    %v1782 = vmax.f32 %v1526, 0.0
    %v1783 = vmax.f32 %v1527, 0.0
    %v1784 = vmax.f32 %v1528, 0.0
    %v1785 = vmax.f32 %v1529, 0.0
    %v1786 = vmax.f32 %v1530, 0.0
    %v1787 = vmax.f32 %v1531, 0.0
    %v1788 = vmax.f32 %v1532, 0.0
    %v1789 = vmax.f32 %v1533, 0.0
    %v1790 = vmax.f32 %v1534, 0.0
    %v1791 = vmax.f32 %v1535, 0.0
    %v1792 = vmax.f32 %v1536, 0.0
    %v1793 = vmax.f32 %v1537, 0.0
    %v1794 = vmax.f32 %v1538, 0.0
    %v1795 = vmax.f32 %v1539, 0.0
    %v1796 = vmax.f32 %v1540, 0.0
    %v1797 = vmax.f32 %v1541, 0.0
    %v1798 = vmax.f32 %v1542, 0.0
    %v1799 = vmax.f32 %v1543, 0.0
    %v1800 = vmax.f32 %v1544, 0.0
    %v1801 = vmax.f32 %v1545, 0.0
    %v1802 = vmax.f32 %v1546, 0.0
    %v1803 = vmax.f32 %v1547, 0.0
    %v1804 = vmax.f32 %v1548, 0.0
    %v1805 = vmax.f32 %v1549, 0.0
    %v1806 = vmax.f32 %v1550, 0.0
    %v1807 = vmax.f32 %v1551, 0.0
    %v1808 = vmax.f32 %v1552, 0.0
    %v1809 = vmax.f32 %v1553, 0.0
    %v1810 = vmax.f32 %v1554, 0.0
    %v1811 = vmax.f32 %v1555, 0.0
    %v1812 = vmax.f32 %v1556, 0.0
    %v1813 = vmax.f32 %v1557, 0.0
    %v1814 = vmax.f32 %v1558, 0.0
    %v1815 = vmax.f32 %v1559, 0.0
    %v1816 = vmax.f32 %v1560, 0.0
    %v1817 = vadd.f32 %v1561, %v1577
    %v1818 = vadd.f32 %v1817, %v1593
    %v1819 = vadd.f32 %v1818, %v1609
    %v1820 = vadd.f32 %v1819, %v1625
    %v1821 = vadd.f32 %v1820, %v1641
    %v1822 = vadd.f32 %v1821, %v1657
    %v1823 = vadd.f32 %v1822, %v1673
    %v1824 = vadd.f32 %v1823, %v1689
    %v1825 = vadd.f32 %v1824, %v1705
    %v1826 = vadd.f32 %v1825, %v1721
    %v1827 = vadd.f32 %v1826, %v1737
    %v1828 = vadd.f32 %v1827, %v1753
    %v1829 = vadd.f32 %v1828, %v1769
    %v1830 = vadd.f32 %v1829, %v1785
    %v1831 = vadd.f32 %v1830, %v1801
    %v1832 = vadd.f32 %v1562, %v1578
    %v1833 = vadd.f32 %v1832, %v1594
    %v1834 = vadd.f32 %v1833, %v1610
    %v1835 = vadd.f32 %v1834, %v1626
    %v1836 = vadd.f32 %v1835, %v1642
    %v1837 = vadd.f32 %v1836, %v1658
    %v1838 = vadd.f32 %v1837, %v1674
    %v1839 = vadd.f32 %v1838, %v1690
    %v1840 = vadd.f32 %v1839, %v1706
    %v1841 = vadd.f32 %v1840, %v1722
    %v1842 = vadd.f32 %v1841, %v1738
    %v1843 = vadd.f32 %v1842, %v1754
    %v1844 = vadd.f32 %v1843, %v1770
    %v1845 = vadd.f32 %v1844, %v1786
    %v1846 = vadd.f32 %v1845, %v1802
    %v1847 = vadd.f32 %v1563, %v1579
    %v1848 = vadd.f32 %v1847, %v1595
    %v1849 = vadd.f32 %v1848, %v1611
    %v1850 = vadd.f32 %v1849, %v1627
    %v1851 = vadd.f32 %v1850, %v1643
    %v1852 = vadd.f32 %v1851, %v1659
    %v1853 = vadd.f32 %v1852, %v1675
    %v1854 = vadd.f32 %v1853, %v1691
    %v1855 = vadd.f32 %v1854, %v1707
    %v1856 = vadd.f32 %v1855, %v1723
    %v1857 = vadd.f32 %v1856, %v1739
    %v1858 = vadd.f32 %v1857, %v1755
    %v1859 = vadd.f32 %v1858, %v1771
    %v1860 = vadd.f32 %v1859, %v1787
    %v1861 = vadd.f32 %v1860, %v1803
    %v1862 = vadd.f32 %v1564, %v1580
    %v1863 = vadd.f32 %v1862, %v1596
    %v1864 = vadd.f32 %v1863, %v1612
    %v1865 = vadd.f32 %v1864, %v1628
    %v1866 = vadd.f32 %v1865, %v1644
    %v1867 = vadd.f32 %v1866, %v1660
    %v1868 = vadd.f32 %v1867, %v1676
    %v1869 = vadd.f32 %v1868, %v1692
    %v1870 = vadd.f32 %v1869, %v1708
    %v1871 = vadd.f32 %v1870, %v1724
    %v1872 = vadd.f32 %v1871, %v1740
    %v1873 = vadd.f32 %v1872, %v1756
    %v1874 = vadd.f32 %v1873, %v1772
    %v1875 = vadd.f32 %v1874, %v1788
    %v1876 = vadd.f32 %v1875, %v1804
    %v1877 = vadd.f32 %v1565, %v1581
    %v1878 = vadd.f32 %v1877, %v1597
    %v1879 = vadd.f32 %v1878, %v1613
    %v1880 = vadd.f32 %v1879, %v1629
    %v1881 = vadd.f32 %v1880, %v1645
    %v1882 = vadd.f32 %v1881, %v1661
    %v1883 = vadd.f32 %v1882, %v1677
    %v1884 = vadd.f32 %v1883, %v1693
    %v1885 = vadd.f32 %v1884, %v1709
    %v1886 = vadd.f32 %v1885, %v1725
    %v1887 = vadd.f32 %v1886, %v1741
    %v1888 = vadd.f32 %v1887, %v1757
    %v1889 = vadd.f32 %v1888, %v1773
    %v1890 = vadd.f32 %v1889, %v1789
    %v1891 = vadd.f32 %v1890, %v1805
    %v1892 = vadd.f32 %v1566, %v1582
    %v1893 = vadd.f32 %v1892, %v1598
    %v1894 = vadd.f32 %v1893, %v1614
    %v1895 = vadd.f32 %v1894, %v1630
    %v1896 = vadd.f32 %v1895, %v1646
    %v1897 = vadd.f32 %v1896, %v1662
    %v1898 = vadd.f32 %v1897, %v1678
    %v1899 = vadd.f32 %v1898, %v1694
    %v1900 = vadd.f32 %v1899, %v1710
    %v1901 = vadd.f32 %v1900, %v1726
    %v1902 = vadd.f32 %v1901, %v1742
    %v1903 = vadd.f32 %v1902, %v1758
    %v1904 = vadd.f32 %v1903, %v1774
    %v1905 = vadd.f32 %v1904, %v1790
    %v1906 = vadd.f32 %v1905, %v1806
    %v1907 = vadd.f32 %v1567, %v1583
    %v1908 = vadd.f32 %v1907, %v1599
    %v1909 = vadd.f32 %v1908, %v1615
    %v1910 = vadd.f32 %v1909, %v1631
    %v1911 = vadd.f32 %v1910, %v1647
    %v1912 = vadd.f32 %v1911, %v1663
    %v1913 = vadd.f32 %v1912, %v1679
    %v1914 = vadd.f32 %v1913, %v1695
    %v1915 = vadd.f32 %v1914, %v1711
    %v1916 = vadd.f32 %v1915, %v1727
    %v1917 = vadd.f32 %v1916, %v1743
    %v1918 = vadd.f32 %v1917, %v1759
    %v1919 = vadd.f32 %v1918, %v1775
    %v1920 = vadd.f32 %v1919, %v1791
    %v1921 = vadd.f32 %v1920, %v1807
    %v1922 = vadd.f32 %v1568, %v1584
    %v1923 = vadd.f32 %v1922, %v1600
    %v1924 = vadd.f32 %v1923, %v1616
    %v1925 = vadd.f32 %v1924, %v1632
    %v1926 = vadd.f32 %v1925, %v1648
    %v1927 = vadd.f32 %v1926, %v1664
    %v1928 = vadd.f32 %v1927, %v1680
    %v1929 = vadd.f32 %v1928, %v1696
    %v1930 = vadd.f32 %v1929, %v1712
    %v1931 = vadd.f32 %v1930, %v1728
    %v1932 = vadd.f32 %v1931, %v1744
    %v1933 = vadd.f32 %v1932, %v1760
    %v1934 = vadd.f32 %v1933, %v1776
    %v1935 = vadd.f32 %v1934, %v1792
    %v1936 = vadd.f32 %v1935, %v1808
    %v1937 = vadd.f32 %v1569, %v1585
    %v1938 = vadd.f32 %v1937, %v1601
    %v1939 = vadd.f32 %v1938, %v1617
    %v1940 = vadd.f32 %v1939, %v1633
    %v1941 = vadd.f32 %v1940, %v1649
    %v1942 = vadd.f32 %v1941, %v1665
    %v1943 = vadd.f32 %v1942, %v1681
    %v1944 = vadd.f32 %v1943, %v1697
    %v1945 = vadd.f32 %v1944, %v1713
    %v1946 = vadd.f32 %v1945, %v1729
    %v1947 = vadd.f32 %v1946, %v1745
    %v1948 = vadd.f32 %v1947, %v1761
    %v1949 = vadd.f32 %v1948, %v1777
    %v1950 = vadd.f32 %v1949, %v1793
    %v1951 = vadd.f32 %v1950, %v1809
    %v1952 = vadd.f32 %v1570, %v1586
    %v1953 = vadd.f32 %v1952, %v1602
    %v1954 = vadd.f32 %v1953, %v1618
    %v1955 = vadd.f32 %v1954, %v1634
    %v1956 = vadd.f32 %v1955, %v1650
    %v1957 = vadd.f32 %v1956, %v1666
    %v1958 = vadd.f32 %v1957, %v1682
    %v1959 = vadd.f32 %v1958, %v1698
    %v1960 = vadd.f32 %v1959, %v1714
    %v1961 = vadd.f32 %v1960, %v1730
    %v1962 = vadd.f32 %v1961, %v1746
    %v1963 = vadd.f32 %v1962, %v1762
    %v1964 = vadd.f32 %v1963, %v1778
    %v1965 = vadd.f32 %v1964, %v1794
    %v1966 = vadd.f32 %v1965, %v1810
    %v1967 = vadd.f32 %v1571, %v1587
    %v1968 = vadd.f32 %v1967, %v1603
    %v1969 = vadd.f32 %v1968, %v1619
    %v1970 = vadd.f32 %v1969, %v1635
    %v1971 = vadd.f32 %v1970, %v1651
    %v1972 = vadd.f32 %v1971, %v1667
    %v1973 = vadd.f32 %v1972, %v1683
    %v1974 = vadd.f32 %v1973, %v1699
    %v1975 = vadd.f32 %v1974, %v1715
    %v1976 = vadd.f32 %v1975, %v1731
    %v1977 = vadd.f32 %v1976, %v1747
    %v1978 = vadd.f32 %v1977, %v1763
    %v1979 = vadd.f32 %v1978, %v1779
    %v1980 = vadd.f32 %v1979, %v1795
    %v1981 = vadd.f32 %v1980, %v1811
    %v1982 = vadd.f32 %v1572, %v1588
    %v1983 = vadd.f32 %v1982, %v1604
    %v1984 = vadd.f32 %v1983, %v1620
    %v1985 = vadd.f32 %v1984, %v1636
    %v1986 = vadd.f32 %v1985, %v1652
    %v1987 = vadd.f32 %v1986, %v1668
    %v1988 = vadd.f32 %v1987, %v1684
    %v1989 = vadd.f32 %v1988, %v1700
    %v1990 = vadd.f32 %v1989, %v1716
    %v1991 = vadd.f32 %v1990, %v1732
    %v1992 = vadd.f32 %v1991, %v1748
    %v1993 = vadd.f32 %v1992, %v1764
    %v1994 = vadd.f32 %v1993, %v1780
    %v1995 = vadd.f32 %v1994, %v1796
    %v1996 = vadd.f32 %v1995, %v1812
    %v1997 = vadd.f32 %v1573, %v1589
    %v1998 = vadd.f32 %v1997, %v1605
    %v1999 = vadd.f32 %v1998, %v1621
    %v2000 = vadd.f32 %v1999, %v1637
    %v2001 = vadd.f32 %v2000, %v1653
    %v2002 = vadd.f32 %v2001, %v1669
    %v2003 = vadd.f32 %v2002, %v1685
    %v2004 = vadd.f32 %v2003, %v1701
    %v2005 = vadd.f32 %v2004, %v1717
    %v2006 = vadd.f32 %v2005, %v1733
    %v2007 = vadd.f32 %v2006, %v1749
    %v2008 = vadd.f32 %v2007, %v1765
    %v2009 = vadd.f32 %v2008, %v1781
    %v2010 = vadd.f32 %v2009, %v1797
    %v2011 = vadd.f32 %v2010, %v1813
    %v2012 = vadd.f32 %v1574, %v1590
    %v2013 = vadd.f32 %v2012, %v1606
    %v2014 = vadd.f32 %v2013, %v1622
    %v2015 = vadd.f32 %v2014, %v1638
    %v2016 = vadd.f32 %v2015, %v1654
    %v2017 = vadd.f32 %v2016, %v1670
    %v2018 = vadd.f32 %v2017, %v1686
    %v2019 = vadd.f32 %v2018, %v1702
    %v2020 = vadd.f32 %v2019, %v1718
    %v2021 = vadd.f32 %v2020, %v1734
    %v2022 = vadd.f32 %v2021, %v1750
    %v2023 = vadd.f32 %v2022, %v1766
    %v2024 = vadd.f32 %v2023, %v1782
    %v2025 = vadd.f32 %v2024, %v1798
    %v2026 = vadd.f32 %v2025, %v1814
    %v2027 = vadd.f32 %v1575, %v1591
    %v2028 = vadd.f32 %v2027, %v1607
    %v2029 = vadd.f32 %v2028, %v1623
    %v2030 = vadd.f32 %v2029, %v1639
    %v2031 = vadd.f32 %v2030, %v1655
    %v2032 = vadd.f32 %v2031, %v1671
    %v2033 = vadd.f32 %v2032, %v1687
    %v2034 = vadd.f32 %v2033, %v1703
    %v2035 = vadd.f32 %v2034, %v1719
    %v2036 = vadd.f32 %v2035, %v1735
    %v2037 = vadd.f32 %v2036, %v1751
    %v2038 = vadd.f32 %v2037, %v1767
    %v2039 = vadd.f32 %v2038, %v1783
    %v2040 = vadd.f32 %v2039, %v1799
    %v2041 = vadd.f32 %v2040, %v1815
    %v2042 = vadd.f32 %v1576, %v1592
    %v2043 = vadd.f32 %v2042, %v1608
    %v2044 = vadd.f32 %v2043, %v1624
    %v2045 = vadd.f32 %v2044, %v1640
    %v2046 = vadd.f32 %v2045, %v1656
    %v2047 = vadd.f32 %v2046, %v1672
    %v2048 = vadd.f32 %v2047, %v1688
    %v2049 = vadd.f32 %v2048, %v1704
    %v2050 = vadd.f32 %v2049, %v1720
    %v2051 = vadd.f32 %v2050, %v1736
    %v2052 = vadd.f32 %v2051, %v1752
    %v2053 = vadd.f32 %v2052, %v1768
    %v2054 = vadd.f32 %v2053, %v1784
    %v2055 = vadd.f32 %v2054, %v1800
    %v2056 = vadd.f32 %v2055, %v1816
    %vm2057 = vcmp.gt.f32.partialorder %v1561, 1e-07
    %vm2058 = vcmp.gt.f32.partialorder %v1562, 1e-07
    %vm2059 = vcmp.gt.f32.partialorder %v1563, 1e-07
    %vm2060 = vcmp.gt.f32.partialorder %v1564, 1e-07
    %vm2061 = vcmp.gt.f32.partialorder %v1565, 1e-07
    %vm2062 = vcmp.gt.f32.partialorder %v1566, 1e-07
    %vm2063 = vcmp.gt.f32.partialorder %v1567, 1e-07
    %vm2064 = vcmp.gt.f32.partialorder %v1568, 1e-07
    %vm2065 = vcmp.gt.f32.partialorder %v1569, 1e-07
    %vm2066 = vcmp.gt.f32.partialorder %v1570, 1e-07
    %vm2067 = vcmp.gt.f32.partialorder %v1571, 1e-07
    %vm2068 = vcmp.gt.f32.partialorder %v1572, 1e-07
    %vm2069 = vcmp.gt.f32.partialorder %v1573, 1e-07
    %vm2070 = vcmp.gt.f32.partialorder %v1574, 1e-07
    %vm2071 = vcmp.gt.f32.partialorder %v1575, 1e-07
    %vm2072 = vcmp.gt.f32.partialorder %v1576, 1e-07
    %vm2073 = vcmp.gt.f32.partialorder %v1577, 1e-07
    %vm2074 = vcmp.gt.f32.partialorder %v1578, 1e-07
    %vm2075 = vcmp.gt.f32.partialorder %v1579, 1e-07
    %vm2076 = vcmp.gt.f32.partialorder %v1580, 1e-07
    %vm2077 = vcmp.gt.f32.partialorder %v1581, 1e-07
    %vm2078 = vcmp.gt.f32.partialorder %v1582, 1e-07
    %vm2079 = vcmp.gt.f32.partialorder %v1583, 1e-07
    %vm2080 = vcmp.gt.f32.partialorder %v1584, 1e-07
    %vm2081 = vcmp.gt.f32.partialorder %v1585, 1e-07
    %vm2082 = vcmp.gt.f32.partialorder %v1586, 1e-07
    %vm2083 = vcmp.gt.f32.partialorder %v1587, 1e-07
    %vm2084 = vcmp.gt.f32.partialorder %v1588, 1e-07
    %vm2085 = vcmp.gt.f32.partialorder %v1589, 1e-07
    %vm2086 = vcmp.gt.f32.partialorder %v1590, 1e-07
    %vm2087 = vcmp.gt.f32.partialorder %v1591, 1e-07
    %vm2088 = vcmp.gt.f32.partialorder %v1592, 1e-07
    %vm2089 = vcmp.gt.f32.partialorder %v1593, 1e-07
    %vm2090 = vcmp.gt.f32.partialorder %v1594, 1e-07
    %vm2091 = vcmp.gt.f32.partialorder %v1595, 1e-07
    %vm2092 = vcmp.gt.f32.partialorder %v1596, 1e-07
    %vm2093 = vcmp.gt.f32.partialorder %v1597, 1e-07
    %vm2094 = vcmp.gt.f32.partialorder %v1598, 1e-07
    %vm2095 = vcmp.gt.f32.partialorder %v1599, 1e-07
    %vm2096 = vcmp.gt.f32.partialorder %v1600, 1e-07
    %vm2097 = vcmp.gt.f32.partialorder %v1601, 1e-07
    %vm2098 = vcmp.gt.f32.partialorder %v1602, 1e-07
    %vm2099 = vcmp.gt.f32.partialorder %v1603, 1e-07
    %vm2100 = vcmp.gt.f32.partialorder %v1604, 1e-07
    %vm2101 = vcmp.gt.f32.partialorder %v1605, 1e-07
    %vm2102 = vcmp.gt.f32.partialorder %v1606, 1e-07
    %vm2103 = vcmp.gt.f32.partialorder %v1607, 1e-07
    %vm2104 = vcmp.gt.f32.partialorder %v1608, 1e-07
    %vm2105 = vcmp.gt.f32.partialorder %v1609, 1e-07
    %vm2106 = vcmp.gt.f32.partialorder %v1610, 1e-07
    %vm2107 = vcmp.gt.f32.partialorder %v1611, 1e-07
    %vm2108 = vcmp.gt.f32.partialorder %v1612, 1e-07
    %vm2109 = vcmp.gt.f32.partialorder %v1613, 1e-07
    %vm2110 = vcmp.gt.f32.partialorder %v1614, 1e-07
    %vm2111 = vcmp.gt.f32.partialorder %v1615, 1e-07
    %vm2112 = vcmp.gt.f32.partialorder %v1616, 1e-07
    %vm2113 = vcmp.gt.f32.partialorder %v1617, 1e-07
    %vm2114 = vcmp.gt.f32.partialorder %v1618, 1e-07
    %vm2115 = vcmp.gt.f32.partialorder %v1619, 1e-07
    %vm2116 = vcmp.gt.f32.partialorder %v1620, 1e-07
    %vm2117 = vcmp.gt.f32.partialorder %v1621, 1e-07
    %vm2118 = vcmp.gt.f32.partialorder %v1622, 1e-07
    %vm2119 = vcmp.gt.f32.partialorder %v1623, 1e-07
    %vm2120 = vcmp.gt.f32.partialorder %v1624, 1e-07
    %vm2121 = vcmp.gt.f32.partialorder %v1625, 1e-07
    %vm2122 = vcmp.gt.f32.partialorder %v1626, 1e-07
    %vm2123 = vcmp.gt.f32.partialorder %v1627, 1e-07
    %vm2124 = vcmp.gt.f32.partialorder %v1628, 1e-07
    %vm2125 = vcmp.gt.f32.partialorder %v1629, 1e-07
    %vm2126 = vcmp.gt.f32.partialorder %v1630, 1e-07
    %vm2127 = vcmp.gt.f32.partialorder %v1631, 1e-07
    %vm2128 = vcmp.gt.f32.partialorder %v1632, 1e-07
    %vm2129 = vcmp.gt.f32.partialorder %v1633, 1e-07
    %vm2130 = vcmp.gt.f32.partialorder %v1634, 1e-07
    %vm2131 = vcmp.gt.f32.partialorder %v1635, 1e-07
    %vm2132 = vcmp.gt.f32.partialorder %v1636, 1e-07
    %vm2133 = vcmp.gt.f32.partialorder %v1637, 1e-07
    %vm2134 = vcmp.gt.f32.partialorder %v1638, 1e-07
    %vm2135 = vcmp.gt.f32.partialorder %v1639, 1e-07
    %vm2136 = vcmp.gt.f32.partialorder %v1640, 1e-07
    %vm2137 = vcmp.gt.f32.partialorder %v1641, 1e-07
    %vm2138 = vcmp.gt.f32.partialorder %v1642, 1e-07
    %vm2139 = vcmp.gt.f32.partialorder %v1643, 1e-07
    %vm2140 = vcmp.gt.f32.partialorder %v1644, 1e-07
    %vm2141 = vcmp.gt.f32.partialorder %v1645, 1e-07
    %vm2142 = vcmp.gt.f32.partialorder %v1646, 1e-07
    %vm2143 = vcmp.gt.f32.partialorder %v1647, 1e-07
    %vm2144 = vcmp.gt.f32.partialorder %v1648, 1e-07
    %vm2145 = vcmp.gt.f32.partialorder %v1649, 1e-07
    %vm2146 = vcmp.gt.f32.partialorder %v1650, 1e-07
    %vm2147 = vcmp.gt.f32.partialorder %v1651, 1e-07
    %vm2148 = vcmp.gt.f32.partialorder %v1652, 1e-07
    %vm2149 = vcmp.gt.f32.partialorder %v1653, 1e-07
    %vm2150 = vcmp.gt.f32.partialorder %v1654, 1e-07
    %vm2151 = vcmp.gt.f32.partialorder %v1655, 1e-07
    %vm2152 = vcmp.gt.f32.partialorder %v1656, 1e-07
    %vm2153 = vcmp.gt.f32.partialorder %v1657, 1e-07
    %vm2154 = vcmp.gt.f32.partialorder %v1658, 1e-07
    %vm2155 = vcmp.gt.f32.partialorder %v1659, 1e-07
    %vm2156 = vcmp.gt.f32.partialorder %v1660, 1e-07
    %vm2157 = vcmp.gt.f32.partialorder %v1661, 1e-07
    %vm2158 = vcmp.gt.f32.partialorder %v1662, 1e-07
    %vm2159 = vcmp.gt.f32.partialorder %v1663, 1e-07
    %vm2160 = vcmp.gt.f32.partialorder %v1664, 1e-07
    %vm2161 = vcmp.gt.f32.partialorder %v1665, 1e-07
    %vm2162 = vcmp.gt.f32.partialorder %v1666, 1e-07
    %vm2163 = vcmp.gt.f32.partialorder %v1667, 1e-07
    %vm2164 = vcmp.gt.f32.partialorder %v1668, 1e-07
    %vm2165 = vcmp.gt.f32.partialorder %v1669, 1e-07
    %vm2166 = vcmp.gt.f32.partialorder %v1670, 1e-07
    %vm2167 = vcmp.gt.f32.partialorder %v1671, 1e-07
    %vm2168 = vcmp.gt.f32.partialorder %v1672, 1e-07
    %vm2169 = vcmp.gt.f32.partialorder %v1673, 1e-07
    %vm2170 = vcmp.gt.f32.partialorder %v1674, 1e-07
    %vm2171 = vcmp.gt.f32.partialorder %v1675, 1e-07
    %vm2172 = vcmp.gt.f32.partialorder %v1676, 1e-07
    %vm2173 = vcmp.gt.f32.partialorder %v1677, 1e-07
    %vm2174 = vcmp.gt.f32.partialorder %v1678, 1e-07
    %vm2175 = vcmp.gt.f32.partialorder %v1679, 1e-07
    %vm2176 = vcmp.gt.f32.partialorder %v1680, 1e-07
    %vm2177 = vcmp.gt.f32.partialorder %v1681, 1e-07
    %vm2178 = vcmp.gt.f32.partialorder %v1682, 1e-07
    %vm2179 = vcmp.gt.f32.partialorder %v1683, 1e-07
    %vm2180 = vcmp.gt.f32.partialorder %v1684, 1e-07
    %vm2181 = vcmp.gt.f32.partialorder %v1685, 1e-07
    %vm2182 = vcmp.gt.f32.partialorder %v1686, 1e-07
    %vm2183 = vcmp.gt.f32.partialorder %v1687, 1e-07
    %vm2184 = vcmp.gt.f32.partialorder %v1688, 1e-07
    %vm2185 = vcmp.gt.f32.partialorder %v1689, 1e-07
    %vm2186 = vcmp.gt.f32.partialorder %v1690, 1e-07
    %vm2187 = vcmp.gt.f32.partialorder %v1691, 1e-07
    %vm2188 = vcmp.gt.f32.partialorder %v1692, 1e-07
    %vm2189 = vcmp.gt.f32.partialorder %v1693, 1e-07
    %vm2190 = vcmp.gt.f32.partialorder %v1694, 1e-07
    %vm2191 = vcmp.gt.f32.partialorder %v1695, 1e-07
    %vm2192 = vcmp.gt.f32.partialorder %v1696, 1e-07
    %vm2193 = vcmp.gt.f32.partialorder %v1697, 1e-07
    %vm2194 = vcmp.gt.f32.partialorder %v1698, 1e-07
    %vm2195 = vcmp.gt.f32.partialorder %v1699, 1e-07
    %vm2196 = vcmp.gt.f32.partialorder %v1700, 1e-07
    %vm2197 = vcmp.gt.f32.partialorder %v1701, 1e-07
    %vm2198 = vcmp.gt.f32.partialorder %v1702, 1e-07
    %vm2199 = vcmp.gt.f32.partialorder %v1703, 1e-07
    %vm2200 = vcmp.gt.f32.partialorder %v1704, 1e-07
    %vm2201 = vcmp.gt.f32.partialorder %v1705, 1e-07
    %vm2202 = vcmp.gt.f32.partialorder %v1706, 1e-07
    %vm2203 = vcmp.gt.f32.partialorder %v1707, 1e-07
    %vm2204 = vcmp.gt.f32.partialorder %v1708, 1e-07
    %vm2205 = vcmp.gt.f32.partialorder %v1709, 1e-07
    %vm2206 = vcmp.gt.f32.partialorder %v1710, 1e-07
    %vm2207 = vcmp.gt.f32.partialorder %v1711, 1e-07
    %vm2208 = vcmp.gt.f32.partialorder %v1712, 1e-07
    %vm2209 = vcmp.gt.f32.partialorder %v1713, 1e-07
    %vm2210 = vcmp.gt.f32.partialorder %v1714, 1e-07
    %vm2211 = vcmp.gt.f32.partialorder %v1715, 1e-07
    %vm2212 = vcmp.gt.f32.partialorder %v1716, 1e-07
    %vm2213 = vcmp.gt.f32.partialorder %v1717, 1e-07
    %vm2214 = vcmp.gt.f32.partialorder %v1718, 1e-07
    %vm2215 = vcmp.gt.f32.partialorder %v1719, 1e-07
    %vm2216 = vcmp.gt.f32.partialorder %v1720, 1e-07
    %vm2217 = vcmp.gt.f32.partialorder %v1721, 1e-07
    %vm2218 = vcmp.gt.f32.partialorder %v1722, 1e-07
    %vm2219 = vcmp.gt.f32.partialorder %v1723, 1e-07
    %vm2220 = vcmp.gt.f32.partialorder %v1724, 1e-07
    %vm2221 = vcmp.gt.f32.partialorder %v1725, 1e-07
    %vm2222 = vcmp.gt.f32.partialorder %v1726, 1e-07
    %vm2223 = vcmp.gt.f32.partialorder %v1727, 1e-07
    %vm2224 = vcmp.gt.f32.partialorder %v1728, 1e-07
    %vm2225 = vcmp.gt.f32.partialorder %v1729, 1e-07
    %vm2226 = vcmp.gt.f32.partialorder %v1730, 1e-07
    %vm2227 = vcmp.gt.f32.partialorder %v1731, 1e-07
    %vm2228 = vcmp.gt.f32.partialorder %v1732, 1e-07
    %vm2229 = vcmp.gt.f32.partialorder %v1733, 1e-07
    %vm2230 = vcmp.gt.f32.partialorder %v1734, 1e-07
    %vm2231 = vcmp.gt.f32.partialorder %v1735, 1e-07
    %vm2232 = vcmp.gt.f32.partialorder %v1736, 1e-07
    %vm2233 = vcmp.gt.f32.partialorder %v1737, 1e-07
    %vm2234 = vcmp.gt.f32.partialorder %v1738, 1e-07
    %vm2235 = vcmp.gt.f32.partialorder %v1739, 1e-07
    %vm2236 = vcmp.gt.f32.partialorder %v1740, 1e-07
    %vm2237 = vcmp.gt.f32.partialorder %v1741, 1e-07
    %vm2238 = vcmp.gt.f32.partialorder %v1742, 1e-07
    %vm2239 = vcmp.gt.f32.partialorder %v1743, 1e-07
    %vm2240 = vcmp.gt.f32.partialorder %v1744, 1e-07
    %vm2241 = vcmp.gt.f32.partialorder %v1745, 1e-07
    %vm2242 = vcmp.gt.f32.partialorder %v1746, 1e-07
    %vm2243 = vcmp.gt.f32.partialorder %v1747, 1e-07
    %vm2244 = vcmp.gt.f32.partialorder %v1748, 1e-07
    %vm2245 = vcmp.gt.f32.partialorder %v1749, 1e-07
    %vm2246 = vcmp.gt.f32.partialorder %v1750, 1e-07
    %vm2247 = vcmp.gt.f32.partialorder %v1751, 1e-07
    %vm2248 = vcmp.gt.f32.partialorder %v1752, 1e-07
    %vm2249 = vcmp.gt.f32.partialorder %v1753, 1e-07
    %vm2250 = vcmp.gt.f32.partialorder %v1754, 1e-07
    %vm2251 = vcmp.gt.f32.partialorder %v1755, 1e-07
    %vm2252 = vcmp.gt.f32.partialorder %v1756, 1e-07
    %vm2253 = vcmp.gt.f32.partialorder %v1757, 1e-07
    %vm2254 = vcmp.gt.f32.partialorder %v1758, 1e-07
    %vm2255 = vcmp.gt.f32.partialorder %v1759, 1e-07
    %vm2256 = vcmp.gt.f32.partialorder %v1760, 1e-07
    %vm2257 = vcmp.gt.f32.partialorder %v1761, 1e-07
    %vm2258 = vcmp.gt.f32.partialorder %v1762, 1e-07
    %vm2259 = vcmp.gt.f32.partialorder %v1763, 1e-07
    %vm2260 = vcmp.gt.f32.partialorder %v1764, 1e-07
    %vm2261 = vcmp.gt.f32.partialorder %v1765, 1e-07
    %vm2262 = vcmp.gt.f32.partialorder %v1766, 1e-07
    %vm2263 = vcmp.gt.f32.partialorder %v1767, 1e-07
    %vm2264 = vcmp.gt.f32.partialorder %v1768, 1e-07
    %vm2265 = vcmp.gt.f32.partialorder %v1769, 1e-07
    %vm2266 = vcmp.gt.f32.partialorder %v1770, 1e-07
    %vm2267 = vcmp.gt.f32.partialorder %v1771, 1e-07
    %vm2268 = vcmp.gt.f32.partialorder %v1772, 1e-07
    %vm2269 = vcmp.gt.f32.partialorder %v1773, 1e-07
    %vm2270 = vcmp.gt.f32.partialorder %v1774, 1e-07
    %vm2271 = vcmp.gt.f32.partialorder %v1775, 1e-07
    %vm2272 = vcmp.gt.f32.partialorder %v1776, 1e-07
    %vm2273 = vcmp.gt.f32.partialorder %v1777, 1e-07
    %vm2274 = vcmp.gt.f32.partialorder %v1778, 1e-07
    %vm2275 = vcmp.gt.f32.partialorder %v1779, 1e-07
    %vm2276 = vcmp.gt.f32.partialorder %v1780, 1e-07
    %vm2277 = vcmp.gt.f32.partialorder %v1781, 1e-07
    %vm2278 = vcmp.gt.f32.partialorder %v1782, 1e-07
    %vm2279 = vcmp.gt.f32.partialorder %v1783, 1e-07
    %vm2280 = vcmp.gt.f32.partialorder %v1784, 1e-07
    %vm2281 = vcmp.gt.f32.partialorder %v1785, 1e-07
    %vm2282 = vcmp.gt.f32.partialorder %v1786, 1e-07
    %vm2283 = vcmp.gt.f32.partialorder %v1787, 1e-07
    %vm2284 = vcmp.gt.f32.partialorder %v1788, 1e-07
    %vm2285 = vcmp.gt.f32.partialorder %v1789, 1e-07
    %vm2286 = vcmp.gt.f32.partialorder %v1790, 1e-07
    %vm2287 = vcmp.gt.f32.partialorder %v1791, 1e-07
    %vm2288 = vcmp.gt.f32.partialorder %v1792, 1e-07
    %vm2289 = vcmp.gt.f32.partialorder %v1793, 1e-07
    %vm2290 = vcmp.gt.f32.partialorder %v1794, 1e-07
    %vm2291 = vcmp.gt.f32.partialorder %v1795, 1e-07
    %vm2292 = vcmp.gt.f32.partialorder %v1796, 1e-07
    %vm2293 = vcmp.gt.f32.partialorder %v1797, 1e-07
    %vm2294 = vcmp.gt.f32.partialorder %v1798, 1e-07
    %vm2295 = vcmp.gt.f32.partialorder %v1799, 1e-07
    %vm2296 = vcmp.gt.f32.partialorder %v1800, 1e-07
    %vm2297 = vcmp.gt.f32.partialorder %v1801, 1e-07
    %vm2298 = vcmp.gt.f32.partialorder %v1802, 1e-07
    %vm2299 = vcmp.gt.f32.partialorder %v1803, 1e-07
    %vm2300 = vcmp.gt.f32.partialorder %v1804, 1e-07
    %vm2301 = vcmp.gt.f32.partialorder %v1805, 1e-07
    %vm2302 = vcmp.gt.f32.partialorder %v1806, 1e-07
    %vm2303 = vcmp.gt.f32.partialorder %v1807, 1e-07
    %vm2304 = vcmp.gt.f32.partialorder %v1808, 1e-07
    %vm2305 = vcmp.gt.f32.partialorder %v1809, 1e-07
    %vm2306 = vcmp.gt.f32.partialorder %v1810, 1e-07
    %vm2307 = vcmp.gt.f32.partialorder %v1811, 1e-07
    %vm2308 = vcmp.gt.f32.partialorder %v1812, 1e-07
    %vm2309 = vcmp.gt.f32.partialorder %v1813, 1e-07
    %vm2310 = vcmp.gt.f32.partialorder %v1814, 1e-07
    %vm2311 = vcmp.gt.f32.partialorder %v1815, 1e-07
    %vm2312 = vcmp.gt.f32.partialorder %v1816, 1e-07
    %v2313 = vsel %vm2057, 1, 0
    %v2314 = vsel %vm2058, 1, 0
    %v2315 = vsel %vm2059, 1, 0
    %v2316 = vsel %vm2060, 1, 0
    %v2317 = vsel %vm2061, 1, 0
    %v2318 = vsel %vm2062, 1, 0
    %v2319 = vsel %vm2063, 1, 0
    %v2320 = vsel %vm2064, 1, 0
    %v2321 = vsel %vm2065, 1, 0
    %v2322 = vsel %vm2066, 1, 0
    %v2323 = vsel %vm2067, 1, 0
    %v2324 = vsel %vm2068, 1, 0
    %v2325 = vsel %vm2069, 1, 0
    %v2326 = vsel %vm2070, 1, 0
    %v2327 = vsel %vm2071, 1, 0
    %v2328 = vsel %vm2072, 1, 0
    %v2329 = vsel %vm2073, 1, 0
    %v2330 = vsel %vm2074, 1, 0
    %v2331 = vsel %vm2075, 1, 0
    %v2332 = vsel %vm2076, 1, 0
    %v2333 = vsel %vm2077, 1, 0
    %v2334 = vsel %vm2078, 1, 0
    %v2335 = vsel %vm2079, 1, 0
    %v2336 = vsel %vm2080, 1, 0
    %v2337 = vsel %vm2081, 1, 0
    %v2338 = vsel %vm2082, 1, 0
    %v2339 = vsel %vm2083, 1, 0
    %v2340 = vsel %vm2084, 1, 0
    %v2341 = vsel %vm2085, 1, 0
    %v2342 = vsel %vm2086, 1, 0
    %v2343 = vsel %vm2087, 1, 0
    %v2344 = vsel %vm2088, 1, 0
    %v2345 = vsel %vm2089, 1, 0
    %v2346 = vsel %vm2090, 1, 0
    %v2347 = vsel %vm2091, 1, 0
    %v2348 = vsel %vm2092, 1, 0
    %v2349 = vsel %vm2093, 1, 0
    %v2350 = vsel %vm2094, 1, 0
    %v2351 = vsel %vm2095, 1, 0
    %v2352 = vsel %vm2096, 1, 0
    %v2353 = vsel %vm2097, 1, 0
    %v2354 = vsel %vm2098, 1, 0
    %v2355 = vsel %vm2099, 1, 0
    %v2356 = vsel %vm2100, 1, 0
    %v2357 = vsel %vm2101, 1, 0
    %v2358 = vsel %vm2102, 1, 0
    %v2359 = vsel %vm2103, 1, 0
    %v2360 = vsel %vm2104, 1, 0
    %v2361 = vsel %vm2105, 1, 0
    %v2362 = vsel %vm2106, 1, 0
    %v2363 = vsel %vm2107, 1, 0
    %v2364 = vsel %vm2108, 1, 0
    %v2365 = vsel %vm2109, 1, 0
    %v2366 = vsel %vm2110, 1, 0
    %v2367 = vsel %vm2111, 1, 0
    %v2368 = vsel %vm2112, 1, 0
    %v2369 = vsel %vm2113, 1, 0
    %v2370 = vsel %vm2114, 1, 0
    %v2371 = vsel %vm2115, 1, 0
    %v2372 = vsel %vm2116, 1, 0
    %v2373 = vsel %vm2117, 1, 0
    %v2374 = vsel %vm2118, 1, 0
    %v2375 = vsel %vm2119, 1, 0
    %v2376 = vsel %vm2120, 1, 0
    %v2377 = vsel %vm2121, 1, 0
    %v2378 = vsel %vm2122, 1, 0
    %v2379 = vsel %vm2123, 1, 0
    %v2380 = vsel %vm2124, 1, 0
    %v2381 = vsel %vm2125, 1, 0
    %v2382 = vsel %vm2126, 1, 0
    %v2383 = vsel %vm2127, 1, 0
    %v2384 = vsel %vm2128, 1, 0
    %v2385 = vsel %vm2129, 1, 0
    %v2386 = vsel %vm2130, 1, 0
    %v2387 = vsel %vm2131, 1, 0
    %v2388 = vsel %vm2132, 1, 0
    %v2389 = vsel %vm2133, 1, 0
    %v2390 = vsel %vm2134, 1, 0
    %v2391 = vsel %vm2135, 1, 0
    %v2392 = vsel %vm2136, 1, 0
    %v2393 = vsel %vm2137, 1, 0
    %v2394 = vsel %vm2138, 1, 0
    %v2395 = vsel %vm2139, 1, 0
    %v2396 = vsel %vm2140, 1, 0
    %v2397 = vsel %vm2141, 1, 0
    %v2398 = vsel %vm2142, 1, 0
    %v2399 = vsel %vm2143, 1, 0
    %v2400 = vsel %vm2144, 1, 0
    %v2401 = vsel %vm2145, 1, 0
    %v2402 = vsel %vm2146, 1, 0
    %v2403 = vsel %vm2147, 1, 0
    %v2404 = vsel %vm2148, 1, 0
    %v2405 = vsel %vm2149, 1, 0
    %v2406 = vsel %vm2150, 1, 0
    %v2407 = vsel %vm2151, 1, 0
    %v2408 = vsel %vm2152, 1, 0
    %v2409 = vsel %vm2153, 1, 0
    %v2410 = vsel %vm2154, 1, 0
    %v2411 = vsel %vm2155, 1, 0
    %v2412 = vsel %vm2156, 1, 0
    %v2413 = vsel %vm2157, 1, 0
    %v2414 = vsel %vm2158, 1, 0
    %v2415 = vsel %vm2159, 1, 0
    %v2416 = vsel %vm2160, 1, 0
    %v2417 = vsel %vm2161, 1, 0
    %v2418 = vsel %vm2162, 1, 0
    %v2419 = vsel %vm2163, 1, 0
    %v2420 = vsel %vm2164, 1, 0
    %v2421 = vsel %vm2165, 1, 0
    %v2422 = vsel %vm2166, 1, 0
    %v2423 = vsel %vm2167, 1, 0
    %v2424 = vsel %vm2168, 1, 0
    %v2425 = vsel %vm2169, 1, 0
    %v2426 = vsel %vm2170, 1, 0
    %v2427 = vsel %vm2171, 1, 0
    %v2428 = vsel %vm2172, 1, 0
    %v2429 = vsel %vm2173, 1, 0
    %v2430 = vsel %vm2174, 1, 0
    %v2431 = vsel %vm2175, 1, 0
    %v2432 = vsel %vm2176, 1, 0
    %v2433 = vsel %vm2177, 1, 0
    %v2434 = vsel %vm2178, 1, 0
    %v2435 = vsel %vm2179, 1, 0
    %v2436 = vsel %vm2180, 1, 0
    %v2437 = vsel %vm2181, 1, 0
    %v2438 = vsel %vm2182, 1, 0
    %v2439 = vsel %vm2183, 1, 0
    %v2440 = vsel %vm2184, 1, 0
    %v2441 = vsel %vm2185, 1, 0
    %v2442 = vsel %vm2186, 1, 0
    %v2443 = vsel %vm2187, 1, 0
    %v2444 = vsel %vm2188, 1, 0
    %v2445 = vsel %vm2189, 1, 0
    %v2446 = vsel %vm2190, 1, 0
    %v2447 = vsel %vm2191, 1, 0
    %v2448 = vsel %vm2192, 1, 0
    %v2449 = vsel %vm2193, 1, 0
    %v2450 = vsel %vm2194, 1, 0
    %v2451 = vsel %vm2195, 1, 0
    %v2452 = vsel %vm2196, 1, 0
    %v2453 = vsel %vm2197, 1, 0
    %v2454 = vsel %vm2198, 1, 0
    %v2455 = vsel %vm2199, 1, 0
    %v2456 = vsel %vm2200, 1, 0
    %v2457 = vsel %vm2201, 1, 0
    %v2458 = vsel %vm2202, 1, 0
    %v2459 = vsel %vm2203, 1, 0
    %v2460 = vsel %vm2204, 1, 0
    %v2461 = vsel %vm2205, 1, 0
    %v2462 = vsel %vm2206, 1, 0
    %v2463 = vsel %vm2207, 1, 0
    %v2464 = vsel %vm2208, 1, 0
    %v2465 = vsel %vm2209, 1, 0
    %v2466 = vsel %vm2210, 1, 0
    %v2467 = vsel %vm2211, 1, 0
    %v2468 = vsel %vm2212, 1, 0
    %v2469 = vsel %vm2213, 1, 0
    %v2470 = vsel %vm2214, 1, 0
    %v2471 = vsel %vm2215, 1, 0
    %v2472 = vsel %vm2216, 1, 0
    %v2473 = vsel %vm2217, 1, 0
    %v2474 = vsel %vm2218, 1, 0
    %v2475 = vsel %vm2219, 1, 0
    %v2476 = vsel %vm2220, 1, 0
    %v2477 = vsel %vm2221, 1, 0
    %v2478 = vsel %vm2222, 1, 0
    %v2479 = vsel %vm2223, 1, 0
    %v2480 = vsel %vm2224, 1, 0
    %v2481 = vsel %vm2225, 1, 0
    %v2482 = vsel %vm2226, 1, 0
    %v2483 = vsel %vm2227, 1, 0
    %v2484 = vsel %vm2228, 1, 0
    %v2485 = vsel %vm2229, 1, 0
    %v2486 = vsel %vm2230, 1, 0
    %v2487 = vsel %vm2231, 1, 0
    %v2488 = vsel %vm2232, 1, 0
    %v2489 = vsel %vm2233, 1, 0
    %v2490 = vsel %vm2234, 1, 0
    %v2491 = vsel %vm2235, 1, 0
    %v2492 = vsel %vm2236, 1, 0
    %v2493 = vsel %vm2237, 1, 0
    %v2494 = vsel %vm2238, 1, 0
    %v2495 = vsel %vm2239, 1, 0
    %v2496 = vsel %vm2240, 1, 0
    %v2497 = vsel %vm2241, 1, 0
    %v2498 = vsel %vm2242, 1, 0
    %v2499 = vsel %vm2243, 1, 0
    %v2500 = vsel %vm2244, 1, 0
    %v2501 = vsel %vm2245, 1, 0
    %v2502 = vsel %vm2246, 1, 0
    %v2503 = vsel %vm2247, 1, 0
    %v2504 = vsel %vm2248, 1, 0
    %v2505 = vsel %vm2249, 1, 0
    %v2506 = vsel %vm2250, 1, 0
    %v2507 = vsel %vm2251, 1, 0
    %v2508 = vsel %vm2252, 1, 0
    %v2509 = vsel %vm2253, 1, 0
    %v2510 = vsel %vm2254, 1, 0
    %v2511 = vsel %vm2255, 1, 0
    %v2512 = vsel %vm2256, 1, 0
    %v2513 = vsel %vm2257, 1, 0
    %v2514 = vsel %vm2258, 1, 0
    %v2515 = vsel %vm2259, 1, 0
    %v2516 = vsel %vm2260, 1, 0
    %v2517 = vsel %vm2261, 1, 0
    %v2518 = vsel %vm2262, 1, 0
    %v2519 = vsel %vm2263, 1, 0
    %v2520 = vsel %vm2264, 1, 0
    %v2521 = vsel %vm2265, 1, 0
    %v2522 = vsel %vm2266, 1, 0
    %v2523 = vsel %vm2267, 1, 0
    %v2524 = vsel %vm2268, 1, 0
    %v2525 = vsel %vm2269, 1, 0
    %v2526 = vsel %vm2270, 1, 0
    %v2527 = vsel %vm2271, 1, 0
    %v2528 = vsel %vm2272, 1, 0
    %v2529 = vsel %vm2273, 1, 0
    %v2530 = vsel %vm2274, 1, 0
    %v2531 = vsel %vm2275, 1, 0
    %v2532 = vsel %vm2276, 1, 0
    %v2533 = vsel %vm2277, 1, 0
    %v2534 = vsel %vm2278, 1, 0
    %v2535 = vsel %vm2279, 1, 0
    %v2536 = vsel %vm2280, 1, 0
    %v2537 = vsel %vm2281, 1, 0
    %v2538 = vsel %vm2282, 1, 0
    %v2539 = vsel %vm2283, 1, 0
    %v2540 = vsel %vm2284, 1, 0
    %v2541 = vsel %vm2285, 1, 0
    %v2542 = vsel %vm2286, 1, 0
    %v2543 = vsel %vm2287, 1, 0
    %v2544 = vsel %vm2288, 1, 0
    %v2545 = vsel %vm2289, 1, 0
    %v2546 = vsel %vm2290, 1, 0
    %v2547 = vsel %vm2291, 1, 0
    %v2548 = vsel %vm2292, 1, 0
    %v2549 = vsel %vm2293, 1, 0
    %v2550 = vsel %vm2294, 1, 0
    %v2551 = vsel %vm2295, 1, 0
    %v2552 = vsel %vm2296, 1, 0
    %v2553 = vsel %vm2297, 1, 0
    %v2554 = vsel %vm2298, 1, 0
    %v2555 = vsel %vm2299, 1, 0
    %v2556 = vsel %vm2300, 1, 0
    %v2557 = vsel %vm2301, 1, 0
    %v2558 = vsel %vm2302, 1, 0
    %v2559 = vsel %vm2303, 1, 0
    %v2560 = vsel %vm2304, 1, 0
    %v2561 = vsel %vm2305, 1, 0
    %v2562 = vsel %vm2306, 1, 0
    %v2563 = vsel %vm2307, 1, 0
    %v2564 = vsel %vm2308, 1, 0
    %v2565 = vsel %vm2309, 1, 0
    %v2566 = vsel %vm2310, 1, 0
    %v2567 = vsel %vm2311, 1, 0
    %v2568 = vsel %vm2312, 1, 0
    %v2569 = vadd.s32 %v2313, %v2329
    %v2570 = vadd.s32 %v2569, %v2345
    %v2571 = vadd.s32 %v2570, %v2361
    %v2572 = vadd.s32 %v2571, %v2377
    %v2573 = vadd.s32 %v2572, %v2393
    %v2574 = vadd.s32 %v2573, %v2409
    %v2575 = vadd.s32 %v2574, %v2425
    %v2576 = vadd.s32 %v2575, %v2441
    %v2577 = vadd.s32 %v2576, %v2457
    %v2578 = vadd.s32 %v2577, %v2473
    %v2579 = vadd.s32 %v2578, %v2489
    %v2580 = vadd.s32 %v2579, %v2505
    %v2581 = vadd.s32 %v2580, %v2521
    %v2582 = vadd.s32 %v2581, %v2537
    %v2583 = vadd.s32 %v2582, %v2553
    %v2584 = vadd.s32 %v2314, %v2330
    %v2585 = vadd.s32 %v2584, %v2346
    %v2586 = vadd.s32 %v2585, %v2362
    %v2587 = vadd.s32 %v2586, %v2378
    %v2588 = vadd.s32 %v2587, %v2394
    %v2589 = vadd.s32 %v2588, %v2410
    %v2590 = vadd.s32 %v2589, %v2426
    %v2591 = vadd.s32 %v2590, %v2442
    %v2592 = vadd.s32 %v2591, %v2458
    %v2593 = vadd.s32 %v2592, %v2474
    %v2594 = vadd.s32 %v2593, %v2490
    %v2595 = vadd.s32 %v2594, %v2506
    %v2596 = vadd.s32 %v2595, %v2522
    %v2597 = vadd.s32 %v2596, %v2538
    %v2598 = vadd.s32 %v2597, %v2554
    %v2599 = vadd.s32 %v2315, %v2331
    %v2600 = vadd.s32 %v2599, %v2347
    %v2601 = vadd.s32 %v2600, %v2363
    %v2602 = vadd.s32 %v2601, %v2379
    %v2603 = vadd.s32 %v2602, %v2395
    %v2604 = vadd.s32 %v2603, %v2411
    %v2605 = vadd.s32 %v2604, %v2427
    %v2606 = vadd.s32 %v2605, %v2443
    %v2607 = vadd.s32 %v2606, %v2459
    %v2608 = vadd.s32 %v2607, %v2475
    %v2609 = vadd.s32 %v2608, %v2491
    %v2610 = vadd.s32 %v2609, %v2507
    %v2611 = vadd.s32 %v2610, %v2523
    %v2612 = vadd.s32 %v2611, %v2539
    %v2613 = vadd.s32 %v2612, %v2555
    %v2614 = vadd.s32 %v2316, %v2332
    %v2615 = vadd.s32 %v2614, %v2348
    %v2616 = vadd.s32 %v2615, %v2364
    %v2617 = vadd.s32 %v2616, %v2380
    %v2618 = vadd.s32 %v2617, %v2396
    %v2619 = vadd.s32 %v2618, %v2412
    %v2620 = vadd.s32 %v2619, %v2428
    %v2621 = vadd.s32 %v2620, %v2444
    %v2622 = vadd.s32 %v2621, %v2460
    %v2623 = vadd.s32 %v2622, %v2476
    %v2624 = vadd.s32 %v2623, %v2492
    %v2625 = vadd.s32 %v2624, %v2508
    %v2626 = vadd.s32 %v2625, %v2524
    %v2627 = vadd.s32 %v2626, %v2540
    %v2628 = vadd.s32 %v2627, %v2556
    %v2629 = vadd.s32 %v2317, %v2333
    %v2630 = vadd.s32 %v2629, %v2349
    %v2631 = vadd.s32 %v2630, %v2365
    %v2632 = vadd.s32 %v2631, %v2381
    %v2633 = vadd.s32 %v2632, %v2397
    %v2634 = vadd.s32 %v2633, %v2413
    %v2635 = vadd.s32 %v2634, %v2429
    %v2636 = vadd.s32 %v2635, %v2445
    %v2637 = vadd.s32 %v2636, %v2461
    %v2638 = vadd.s32 %v2637, %v2477
    %v2639 = vadd.s32 %v2638, %v2493
    %v2640 = vadd.s32 %v2639, %v2509
    %v2641 = vadd.s32 %v2640, %v2525
    %v2642 = vadd.s32 %v2641, %v2541
    %v2643 = vadd.s32 %v2642, %v2557
    %v2644 = vadd.s32 %v2318, %v2334
    %v2645 = vadd.s32 %v2644, %v2350
    %v2646 = vadd.s32 %v2645, %v2366
    %v2647 = vadd.s32 %v2646, %v2382
    %v2648 = vadd.s32 %v2647, %v2398
    %v2649 = vadd.s32 %v2648, %v2414
    %v2650 = vadd.s32 %v2649, %v2430
    %v2651 = vadd.s32 %v2650, %v2446
    %v2652 = vadd.s32 %v2651, %v2462
    %v2653 = vadd.s32 %v2652, %v2478
    %v2654 = vadd.s32 %v2653, %v2494
    %v2655 = vadd.s32 %v2654, %v2510
    %v2656 = vadd.s32 %v2655, %v2526
    %v2657 = vadd.s32 %v2656, %v2542
    %v2658 = vadd.s32 %v2657, %v2558
    %v2659 = vadd.s32 %v2319, %v2335
    %v2660 = vadd.s32 %v2659, %v2351
    %v2661 = vadd.s32 %v2660, %v2367
    %v2662 = vadd.s32 %v2661, %v2383
    %v2663 = vadd.s32 %v2662, %v2399
    %v2664 = vadd.s32 %v2663, %v2415
    %v2665 = vadd.s32 %v2664, %v2431
    %v2666 = vadd.s32 %v2665, %v2447
    %v2667 = vadd.s32 %v2666, %v2463
    %v2668 = vadd.s32 %v2667, %v2479
    %v2669 = vadd.s32 %v2668, %v2495
    %v2670 = vadd.s32 %v2669, %v2511
    %v2671 = vadd.s32 %v2670, %v2527
    %v2672 = vadd.s32 %v2671, %v2543
    %v2673 = vadd.s32 %v2672, %v2559
    %v2674 = vadd.s32 %v2320, %v2336
    %v2675 = vadd.s32 %v2674, %v2352
    %v2676 = vadd.s32 %v2675, %v2368
    %v2677 = vadd.s32 %v2676, %v2384
    %v2678 = vadd.s32 %v2677, %v2400
    %v2679 = vadd.s32 %v2678, %v2416
    %v2680 = vadd.s32 %v2679, %v2432
    %v2681 = vadd.s32 %v2680, %v2448
    %v2682 = vadd.s32 %v2681, %v2464
    %v2683 = vadd.s32 %v2682, %v2480
    %v2684 = vadd.s32 %v2683, %v2496
    %v2685 = vadd.s32 %v2684, %v2512
    %v2686 = vadd.s32 %v2685, %v2528
    %v2687 = vadd.s32 %v2686, %v2544
    %v2688 = vadd.s32 %v2687, %v2560
    %v2689 = vadd.s32 %v2321, %v2337
    %v2690 = vadd.s32 %v2689, %v2353
    %v2691 = vadd.s32 %v2690, %v2369
    %v2692 = vadd.s32 %v2691, %v2385
    %v2693 = vadd.s32 %v2692, %v2401
    %v2694 = vadd.s32 %v2693, %v2417
    %v2695 = vadd.s32 %v2694, %v2433
    %v2696 = vadd.s32 %v2695, %v2449
    %v2697 = vadd.s32 %v2696, %v2465
    %v2698 = vadd.s32 %v2697, %v2481
    %v2699 = vadd.s32 %v2698, %v2497
    %v2700 = vadd.s32 %v2699, %v2513
    %v2701 = vadd.s32 %v2700, %v2529
    %v2702 = vadd.s32 %v2701, %v2545
    %v2703 = vadd.s32 %v2702, %v2561
    %v2704 = vadd.s32 %v2322, %v2338
    %v2705 = vadd.s32 %v2704, %v2354
    %v2706 = vadd.s32 %v2705, %v2370
    %v2707 = vadd.s32 %v2706, %v2386
    %v2708 = vadd.s32 %v2707, %v2402
    %v2709 = vadd.s32 %v2708, %v2418
    %v2710 = vadd.s32 %v2709, %v2434
    %v2711 = vadd.s32 %v2710, %v2450
    %v2712 = vadd.s32 %v2711, %v2466
    %v2713 = vadd.s32 %v2712, %v2482
    %v2714 = vadd.s32 %v2713, %v2498
    %v2715 = vadd.s32 %v2714, %v2514
    %v2716 = vadd.s32 %v2715, %v2530
    %v2717 = vadd.s32 %v2716, %v2546
    %v2718 = vadd.s32 %v2717, %v2562
    %v2719 = vadd.s32 %v2323, %v2339
    %v2720 = vadd.s32 %v2719, %v2355
    %v2721 = vadd.s32 %v2720, %v2371
    %v2722 = vadd.s32 %v2721, %v2387
    %v2723 = vadd.s32 %v2722, %v2403
    %v2724 = vadd.s32 %v2723, %v2419
    %v2725 = vadd.s32 %v2724, %v2435
    %v2726 = vadd.s32 %v2725, %v2451
    %v2727 = vadd.s32 %v2726, %v2467
    %v2728 = vadd.s32 %v2727, %v2483
    %v2729 = vadd.s32 %v2728, %v2499
    %v2730 = vadd.s32 %v2729, %v2515
    %v2731 = vadd.s32 %v2730, %v2531
    %v2732 = vadd.s32 %v2731, %v2547
    %v2733 = vadd.s32 %v2732, %v2563
    %v2734 = vadd.s32 %v2324, %v2340
    %v2735 = vadd.s32 %v2734, %v2356
    %v2736 = vadd.s32 %v2735, %v2372
    %v2737 = vadd.s32 %v2736, %v2388
    %v2738 = vadd.s32 %v2737, %v2404
    %v2739 = vadd.s32 %v2738, %v2420
    %v2740 = vadd.s32 %v2739, %v2436
    %v2741 = vadd.s32 %v2740, %v2452
    %v2742 = vadd.s32 %v2741, %v2468
    %v2743 = vadd.s32 %v2742, %v2484
    %v2744 = vadd.s32 %v2743, %v2500
    %v2745 = vadd.s32 %v2744, %v2516
    %v2746 = vadd.s32 %v2745, %v2532
    %v2747 = vadd.s32 %v2746, %v2548
    %v2748 = vadd.s32 %v2747, %v2564
    %v2749 = vadd.s32 %v2325, %v2341
    %v2750 = vadd.s32 %v2749, %v2357
    %v2751 = vadd.s32 %v2750, %v2373
    %v2752 = vadd.s32 %v2751, %v2389
    %v2753 = vadd.s32 %v2752, %v2405
    %v2754 = vadd.s32 %v2753, %v2421
    %v2755 = vadd.s32 %v2754, %v2437
    %v2756 = vadd.s32 %v2755, %v2453
    %v2757 = vadd.s32 %v2756, %v2469
    %v2758 = vadd.s32 %v2757, %v2485
    %v2759 = vadd.s32 %v2758, %v2501
    %v2760 = vadd.s32 %v2759, %v2517
    %v2761 = vadd.s32 %v2760, %v2533
    %v2762 = vadd.s32 %v2761, %v2549
    %v2763 = vadd.s32 %v2762, %v2565
    %v2764 = vadd.s32 %v2326, %v2342
    %v2765 = vadd.s32 %v2764, %v2358
    %v2766 = vadd.s32 %v2765, %v2374
    %v2767 = vadd.s32 %v2766, %v2390
    %v2768 = vadd.s32 %v2767, %v2406
    %v2769 = vadd.s32 %v2768, %v2422
    %v2770 = vadd.s32 %v2769, %v2438
    %v2771 = vadd.s32 %v2770, %v2454
    %v2772 = vadd.s32 %v2771, %v2470
    %v2773 = vadd.s32 %v2772, %v2486
    %v2774 = vadd.s32 %v2773, %v2502
    %v2775 = vadd.s32 %v2774, %v2518
    %v2776 = vadd.s32 %v2775, %v2534
    %v2777 = vadd.s32 %v2776, %v2550
    %v2778 = vadd.s32 %v2777, %v2566
    %v2779 = vadd.s32 %v2327, %v2343
    %v2780 = vadd.s32 %v2779, %v2359
    %v2781 = vadd.s32 %v2780, %v2375
    %v2782 = vadd.s32 %v2781, %v2391
    %v2783 = vadd.s32 %v2782, %v2407
    %v2784 = vadd.s32 %v2783, %v2423
    %v2785 = vadd.s32 %v2784, %v2439
    %v2786 = vadd.s32 %v2785, %v2455
    %v2787 = vadd.s32 %v2786, %v2471
    %v2788 = vadd.s32 %v2787, %v2487
    %v2789 = vadd.s32 %v2788, %v2503
    %v2790 = vadd.s32 %v2789, %v2519
    %v2791 = vadd.s32 %v2790, %v2535
    %v2792 = vadd.s32 %v2791, %v2551
    %v2793 = vadd.s32 %v2792, %v2567
    %v2794 = vadd.s32 %v2328, %v2344
    %v2795 = vadd.s32 %v2794, %v2360
    %v2796 = vadd.s32 %v2795, %v2376
    %v2797 = vadd.s32 %v2796, %v2392
    %v2798 = vadd.s32 %v2797, %v2408
    %v2799 = vadd.s32 %v2798, %v2424
    %v2800 = vadd.s32 %v2799, %v2440
    %v2801 = vadd.s32 %v2800, %v2456
    %v2802 = vadd.s32 %v2801, %v2472
    %v2803 = vadd.s32 %v2802, %v2488
    %v2804 = vadd.s32 %v2803, %v2504
    %v2805 = vadd.s32 %v2804, %v2520
    %v2806 = vadd.s32 %v2805, %v2536
    %v2807 = vadd.s32 %v2806, %v2552
    %v2808 = vadd.s32 %v2807, %v2568
    %v2809 = vadd.f32 %v1831, %v1846
    %v2810 = vadd.s32 %v2583, %v2598
    %v2811 = vadd.f32 %v2809, %v1861
    %v2812 = vadd.s32 %v2810, %v2613
    %v2813 = vadd.f32 %v2811, %v1876
    %v2814 = vadd.s32 %v2812, %v2628
    %v2815 = vadd.f32 %v2813, %v1891
    %v2816 = vadd.s32 %v2814, %v2643
    %v2817 = vadd.f32 %v2815, %v1906
    %v2818 = vadd.s32 %v2816, %v2658
    %v2819 = vadd.f32 %v2817, %v1921
    %v2820 = vadd.s32 %v2818, %v2673
    %v2821 = vadd.f32 %v2819, %v1936
    %v2822 = vadd.s32 %v2820, %v2688
    %v2823 = vadd.f32 %v2821, %v1951
    %v2824 = vadd.s32 %v2822, %v2703
    %v2825 = vadd.f32 %v2823, %v1966
    %v2826 = vadd.s32 %v2824, %v2718
    %v2827 = vadd.f32 %v2825, %v1981
    %v2828 = vadd.s32 %v2826, %v2733
    %v2829 = vadd.f32 %v2827, %v1996
    %v2830 = vadd.s32 %v2828, %v2748
    %v2831 = vadd.f32 %v2829, %v2011
    %v2832 = vadd.s32 %v2830, %v2763
    %v2833 = vadd.f32 %v2831, %v2026
    %v2834 = vadd.s32 %v2832, %v2778
    %v2835 = vadd.f32 %v2833, %v2041
    %v2836 = vadd.s32 %v2834, %v2793
    %v2837 = vadd.f32 %v2835, %v2056
    %v2838 = vadd.s32 %v2836, %v2808
    %v2839 = vld [vmem:[#allocation7] sm:$0xff]
    %v2840 = vadd.f32 %v2839, %v2837
    %2841 = vst [vmem:[#allocation7] sm:$0xff] %v2840
    %v2842 = vld [vmem:[#allocation8] sm:$0xff]
    %v2843 = vadd.s32 %v2842, %v2838
    %2844 = vst [vmem:[#allocation8] sm:$0xff] %v2843
    // Predicated region
    $region22: #{tpu_custom_call.1} parent=1 // pred_check
      _
    $region23: #{tpu_custom_call.1} parent=1 // pred_check_branch
      %2846 = sbr.rel (0) target = $region25
    $region24: #{tpu_custom_call.1} parent=1 // pred_region
      %s2848 = ssub.s32 128, 128
      %2849 = vsyncadd [#allocation4], %s2848
      %s2851 = sshll.u32 [#allocation7], 4
      %s2852 = int_to_ptr.vmem [resolvable:$true] %s2851
      %2854 = dma.vmem_to_hbm [thread:$0]  %s2852, 128, %s2, [#allocation4]
    $region25: #{tpu_custom_call.1} parent=1 // pred_fallthru
      _
    // Predicated region
    $region26: #{tpu_custom_call.1} parent=1 // pred_check
      _
    $region27: #{tpu_custom_call.1} parent=1 // pred_check_branch
      %2856 = sbr.rel (0) target = $region29
    $region28: #{tpu_custom_call.1} parent=1 // pred_region
      %s2858 = ssub.s32 128, 128
      %2859 = vsyncadd [#allocation9], %s2858
      %s2861 = sshll.u32 [#allocation8], 4
      %s2862 = int_to_ptr.vmem [resolvable:$true] %s2861
      %2864 = dma.vmem_to_hbm [thread:$0]  %s2862, 128, %s3, [#allocation9]
    $region29: #{tpu_custom_call.1} parent=1 // pred_fallthru
      _
    // Predicated region
    $region30: #{tpu_custom_call.1} parent=1 // pred_check
      _
    $region31: #{tpu_custom_call.1} parent=1 // pred_check_branch
      %2866 = sbr.rel (0) target = $region33
    $region32: #{tpu_custom_call.1} parent=1 // pred_region
      %2867 = dma.done [#allocation4], 128
    $region33: #{tpu_custom_call.1} parent=1 // pred_fallthru
      _
    // Predicated region
    $region34: #{tpu_custom_call.1} parent=1 // pred_check
      _
    $region35: #{tpu_custom_call.1} parent=1 // pred_check_branch
      %2869 = sbr.rel (0) target = $region37
    $region36: #{tpu_custom_call.1} parent=1 // pred_region
      %2870 = dma.done [#allocation9], 128
    $region37: #{tpu_custom_call.1} parent=1 // pred_fallthru
      _
    %2871 = vsyncpa [#allocation3], 1
    %2872 = vsyncpa [#allocation6], 1
    %2873 = vsyncpa [#allocation4], 1
    %2874 = vsyncpa [#allocation9], 1

</llo_original>
